<compile_context>
chip_gen: v5e
topology: v5e:2x2
jax: 0.10.0
libtpu: 0.0.40
codegen_flags: <defaults>
</compile_context>

<pallas_src>
import math
import functools

import jax
import jax.numpy as jnp
from jax import lax
from jax.experimental import pallas as pl
from jax.experimental.pallas import tpu as pltpu


def samformer_stack_kernel(
    x_ref,      # (BS, D)                 input activations (consumed only at l == 0)
    wqkv_ref,   # (1, D, 3D)      bf16    fused Q/K/V weights, input-major, Q-scale folded in
    wo_ref,     # (1, D, D)       bf16    attention output projection, input-major
    w1_ref,     # (1, nC, D, C)   bf16    FFN first weight, chunked along Dff
    b1_ref,     # (1, nC, 1, C)   bf16    FFN first bias, chunked along Dff
    w2_ref,     # (1, nC, C, D)   bf16    FFN second weight, chunked along Dff
    bqkv_ref,   # (1, 1, 3D)      f32     [bq | bk | bv] packed lane-contiguously
    vec_ref,    # (1, 6, D)       f32     rows: [bo, ln1w, ln1b, b2, ln2w, ln2b]
    o_ref,      # (BS, D)                 output (written only at the last layer)
    xacc_ref,   # (BS, D)         f32     VMEM scratch: activation carried across layers
    *, B: int, S: int, D: int, nhead: int, eps: float,
):
    l = pl.program_id(0)
    BS = B * S
    dh = D // nhead
    n_chunks = w1_ref.shape[1]

    # Load x into the resident VMEM accumulator once, at the first layer.
    @pl.when(l == 0)
    def _():
        xacc_ref[...] = x_ref[...].astype(jnp.float32)

    x = xacc_ref[...]                                     # (BS, D) f32

    vecs = vec_ref[0]                                     # (6, D) f32
    bo, ln1w, ln1b = vecs[0:1], vecs[1:2], vecs[2:3]
    b2, ln2w, ln2b = vecs[3:4], vecs[4:5], vecs[5:6]

    # ---- multi-head self-attention (all heads batched) --------------------
    x_bf = x.astype(jnp.bfloat16)
    qkv = jnp.dot(x_bf, wqkv_ref[0], preferred_element_type=jnp.float32)   # (BS, 3D)
    qkv = qkv + bqkv_ref[0]                               # single (1, 3D) broadcast add

    def heads(base):
        # (BS, 3D) -> (nhead*B, S, dh) using only lane slices + leading-dim ops.
        return jnp.stack(
            [qkv[:, base + h * dh: base + (h + 1) * dh].reshape(B, S, dh)
             for h in range(nhead)],
            axis=0,
        ).reshape(nhead * B, S, dh).astype(jnp.bfloat16)

    qh, kh, vh = heads(0), heads(D), heads(2 * D)         # softmax scale folded into Wq

    s = jnp.einsum('hqd,hkd->hqk', qh, kh,
                   preferred_element_type=jnp.float32)    # (nhead*B, S, S) f32
    s = s - jnp.max(s, axis=-1, keepdims=True)
    p = jnp.exp(s)
    p = p * pl.reciprocal(jnp.sum(p, axis=-1, keepdims=True), approx=True)
    ctx = jnp.einsum('hqk,hkd->hqd', p.astype(jnp.bfloat16), vh,
                     preferred_element_type=jnp.float32)  # (nhead*B, S, dh) f32

    ctx4 = ctx.reshape(nhead, B, S, dh)
    ctx_cat = jnp.concatenate(
        [ctx4[h].reshape(BS, dh) for h in range(nhead)], axis=-1)          # (BS, D)
    attn = jnp.dot(ctx_cat.astype(jnp.bfloat16), wo_ref[0],
                   preferred_element_type=jnp.float32) + bo                # (BS, D)

    # residual + LayerNorm 1 (post-norm), statistics in f32
    y = x + attn
    mu = jnp.mean(y, axis=-1, keepdims=True)
    var = jnp.mean((y - mu) * (y - mu), axis=-1, keepdims=True)
    y = (y - mu) * lax.rsqrt(var + eps) * ln1w + ln1b

    # ---- feed-forward, chunked over Dff (bounds vreg live set) -------------
    y_bf = y.astype(jnp.bfloat16)

    def ffn_step(c, acc):
        w1c = w1_ref[0, c]                                # (D, C) bf16, leading-dim index
        b1c = b1_ref[0, c]                                # (1, C) bf16
        h1c = jnp.dot(y_bf, w1c, preferred_element_type=jnp.float32) + b1c
        h1c = jnp.maximum(h1c, 0.0).astype(jnp.bfloat16)  # ReLU (PyTorch default)
        w2c = w2_ref[0, c]                                # (C, D) bf16
        return acc + jnp.dot(h1c, w2c, preferred_element_type=jnp.float32)

    h2 = lax.fori_loop(0, n_chunks, ffn_step,
                       jnp.zeros((BS, D), jnp.float32), unroll=True)
    h2 = h2 + b2

    # residual + LayerNorm 2
    z = y + h2
    mu = jnp.mean(z, axis=-1, keepdims=True)
    var = jnp.mean((z - mu) * (z - mu), axis=-1, keepdims=True)
    z = (z - mu) * lax.rsqrt(var + eps) * ln2w + ln2b

    xacc_ref[...] = z                                     # carry to the next layer

    @pl.when(l == pl.num_programs(0) - 1)
    def _():
        o_ref[...] = z.astype(o_ref.dtype)


def samformer_block(x, params, *, nhead, eps=1e-5):
    """Apply the full stack of post-norm TransformerEncoderLayers in one pallas_call."""
    B, S, D = x.shape
    assert D % nhead == 0, "d_model must be divisible by nhead"
    BS = B * S
    L, n_chunks, Dw, chunk = params["w1c"].shape
    assert Dw == D

    kern = functools.partial(samformer_stack_kernel,
                             B=B, S=S, D=D, nhead=nhead, eps=eps)

    out2d = pl.pallas_call(
        kern,
        out_shape=jax.ShapeDtypeStruct((BS, D), x.dtype),
        grid_spec=pltpu.PrefetchScalarGridSpec(
            num_scalar_prefetch=0,
            grid=(L,),
            in_specs=[
                pl.BlockSpec((BS, D), lambda l: (0, 0)),                  # x (constant block)
                pl.BlockSpec((1, D, 3 * D), lambda l: (l, 0, 0)),         # wqkvT
                pl.BlockSpec((1, D, D), lambda l: (l, 0, 0)),             # woT
                pl.BlockSpec((1, n_chunks, D, chunk), lambda l: (l, 0, 0, 0)),   # w1 chunks
                pl.BlockSpec((1, n_chunks, 1, chunk), lambda l: (l, 0, 0, 0)),   # b1 chunks
                pl.BlockSpec((1, n_chunks, chunk, D), lambda l: (l, 0, 0, 0)),   # w2 chunks
                pl.BlockSpec((1, 1, 3 * D), lambda l: (l, 0, 0)),         # packed qkv bias
                pl.BlockSpec((1, 6, D), lambda l: (l, 0, 0)),             # bo / LN / b2 rows
            ],
            out_specs=pl.BlockSpec((BS, D), lambda l: (0, 0)),            # resident output
            scratch_shapes=[pltpu.VMEM((BS, D), jnp.float32)],
        ),
        compiler_params=pltpu.CompilerParams(
            dimension_semantics=("arbitrary",),   # layer axis carries state -> sequential
        ),
    )(x.reshape(BS, D), params["wqkvT"], params["woT"],
      params["w1c"], params["b1c"], params["w2c"],
      params["bqkv"], params["vecs"])
    return out2d.reshape(B, S, D)


def init_stacked_params(key, num_layers, d_model, d_ff, nhead,
                        *, ffn_chunk=512, weight_dtype=jnp.bfloat16):
    """Build the layer-stacked parameter arrays consumed by the fused kernel.

    Weights are stored pre-transposed (input-major, so the kernel computes x @ W^T as
    x @ WT) and in bf16; the 1/sqrt(dh) softmax scale is folded into the Q columns of
    wqkvT (and the Q bias); FFN weights/bias are pre-chunked along Dff so the kernel
    indexes a leading chunk axis; biases / LayerNorm params are packed small arrays.
    """
    assert d_model % nhead == 0
    dh = d_model // nhead
    qscale = 1.0 / math.sqrt(dh)
    if d_ff % ffn_chunk != 0:
        ffn_chunk = d_ff
    n_chunks = d_ff // ffn_chunk

    s_attn = 1.0 / math.sqrt(d_model)
    s_ff2 = 1.0 / math.sqrt(d_ff)
    wqkvT, woT, w1T, w2T, b1, bqkv, vecs = ([] for _ in range(7))
    for k in jax.random.split(key, num_layers):
        k0, k1, k2, k3, k4, k5 = jax.random.split(k, 6)
        wq = jax.random.normal(k0, (d_model, 3 * d_model), jnp.float32) * s_attn
        wq = wq.at[:, :d_model].multiply(qscale)          # fold 1/sqrt(dh) into Q cols
        wqkvT.append(wq)
        woT.append(jax.random.normal(k1, (d_model, d_model), jnp.float32) * s_attn)
        w1T.append(jax.random.normal(k2, (d_model, d_ff), jnp.float32) * s_attn)
        w2T.append(jax.random.normal(k3, (d_ff, d_model), jnp.float32) * s_ff2)
        b1.append(jax.random.normal(k4, (1, d_ff), jnp.float32) * 0.01)
        # packed qkv bias row (Q part carries the folded scale; zero here anyway)
        bqkv.append(jnp.zeros((1, 3 * d_model), jnp.float32))
        # packed rows: [bo, ln1w, ln1b, b2, ln2w, ln2b]
        vecs.append(jnp.concatenate([
            jnp.zeros((1, d_model), jnp.float32),                       # bo
            jnp.ones((1, d_model), jnp.float32),                        # ln1w
            jnp.zeros((1, d_model), jnp.float32),                       # ln1b
            jax.random.normal(k5, (1, d_model), jnp.float32) * 0.01,    # b2
            jnp.ones((1, d_model), jnp.float32),                        # ln2w
            jnp.zeros((1, d_model), jnp.float32),                       # ln2b
        ], axis=0))

    L = num_layers
    w1T = jnp.stack(w1T)                                  # (L, D, Dff)
    w2T = jnp.stack(w2T)                                  # (L, Dff, D)
    b1 = jnp.stack(b1)                                    # (L, 1, Dff)
    # Pre-chunk FFN params along Dff so the kernel only dynamic-indexes leading dims.
    w1c = (w1T.reshape(L, d_model, n_chunks, ffn_chunk)
               .transpose(0, 2, 1, 3).astype(weight_dtype))            # (L, nC, D, C)
    w2c = w2T.reshape(L, n_chunks, ffn_chunk, d_model).astype(weight_dtype)  # (L, nC, C, D)
    b1c = b1.reshape(L, n_chunks, 1, ffn_chunk).astype(jnp.bfloat16)         # (L, nC, 1, C)

    return {
        "wqkvT": jnp.stack(wqkvT).astype(weight_dtype),   # (L, D, 3D)
        "woT": jnp.stack(woT).astype(weight_dtype),       # (L, D, D)
        "w1c": w1c,
        "b1c": b1c,
        "w2c": w2c,
        "bqkv": jnp.stack(bqkv),                          # (L, 1, 3D) f32
        "vecs": jnp.stack(vecs),                          # (L, 6, D)  f32
    }


if __name__ == "__main__":
    # Shapes consistent with SAMformerBlock(d_model=32, nhead=4, num_layers=2)
    B, S, d_model, nhead, num_layers = 2, 8, 32, 4, 2
    d_ff = 2048  # nn.TransformerEncoderLayer default dim_feedforward

    key = jax.random.PRNGKey(0)
    k_x, k_p = jax.random.split(key)

    x = jax.random.normal(k_x, (B, S, d_model), jnp.float32)
    params = init_stacked_params(k_p, num_layers, d_model, d_ff, nhead)

    out = samformer_block(x, params, nhead=nhead)
    out = jax.block_until_ready(out)

    assert out.shape == (B, S, d_model)
    assert bool(jnp.all(jnp.isfinite(out)))
    print("KERNEL_OK")
</pallas_src>

<mosaic_0001>
module attributes {stable_mosaic.version = 11 : i64} {
  func.func @samformer_stack_kernel(%arg0: i32, %arg1: memref<16x32xf32, #tpu.memory_space<vmem>>, %arg2: memref<1x32x96xbf16, #tpu.memory_space<vmem>>, %arg3: memref<1x32x32xbf16, #tpu.memory_space<vmem>>, %arg4: memref<1x4x32x512xbf16, #tpu.memory_space<vmem>>, %arg5: memref<1x4x1x512xbf16, #tpu.memory_space<vmem>>, %arg6: memref<1x4x512x32xbf16, #tpu.memory_space<vmem>>, %arg7: memref<1x1x96xf32, #tpu.memory_space<vmem>>, %arg8: memref<1x6x32xf32, #tpu.memory_space<vmem>>, %arg9: memref<16x32xf32, #tpu.memory_space<vmem>>, %arg10: memref<16x32xf32, #tpu.memory_space<vmem>>) attributes {dimension_semantics = [#tpu.dimension_semantics<arbitrary>], iteration_bounds = array<i64: 2>, scalar_prefetch = 0 : i64, scratch_operands = 1 : i64, tpu.core_type = #tpu.core_type<tc>, window_params = [{pipeline_mode = #tpu.pipeline_mode<synchronous>, transform_indices = @transform_0, window_bounds = array<i64: 16, 32>}, {transform_indices = @transform_1, window_bounds = array<i64: 1, 32, 96>}, {transform_indices = @transform_2, window_bounds = array<i64: 1, 32, 32>}, {transform_indices = @transform_3, window_bounds = array<i64: 1, 4, 32, 512>}, {transform_indices = @transform_4, window_bounds = array<i64: 1, 4, 1, 512>}, {transform_indices = @transform_5, window_bounds = array<i64: 1, 4, 512, 32>}, {transform_indices = @transform_6, window_bounds = array<i64: 1, 1, 96>}, {transform_indices = @transform_7, window_bounds = array<i64: 1, 6, 32>}, {pipeline_mode = #tpu.pipeline_mode<synchronous>, transform_indices = @transform_8, window_bounds = array<i64: 16, 32>}]} {
    %c0_i32 = arith.constant 0 : i32
    %0 = arith.cmpi eq, %arg0, %c0_i32 : i32
    %1 = arith.extui %0 : i1 to i32
    %c0_i32_0 = arith.constant 0 : i32
    %2 = arith.cmpi ne, %1, %c0_i32_0 : i32
    scf.if %2 {
      %c0_83 = arith.constant 0 : index
      %c0_84 = arith.constant 0 : index
      %228 = vector.load %arg1[%c0_83, %c0_84] : memref<16x32xf32, #tpu.memory_space<vmem>>, vector<16x32xf32>
      %c0_85 = arith.constant 0 : index
      %c0_86 = arith.constant 0 : index
      %229 = vector.load %arg10[%c0_85, %c0_86] : memref<16x32xf32, #tpu.memory_space<vmem>>, vector<16x32xf32>
      tpu.vector_store %arg10[%c0_85, %c0_86], %228 {strides = array<i32>} : memref<16x32xf32, #tpu.memory_space<vmem>>, vector<16x32xf32>,
    } else {
    }
    %c0 = arith.constant 0 : index
    %c0_1 = arith.constant 0 : index
    %3 = vector.load %arg10[%c0, %c0_1] : memref<16x32xf32, #tpu.memory_space<vmem>>, vector<16x32xf32>
    %c0_2 = arith.constant 0 : index
    %c0_3 = arith.constant 0 : index
    %c0_4 = arith.constant 0 : index
    %4 = vector.load %arg8[%c0_2, %c0_3, %c0_4] : memref<1x6x32xf32, #tpu.memory_space<vmem>>, vector<1x6x32xf32>
    %5 = vector.shape_cast %4 : vector<1x6x32xf32> to vector<6x32xf32>
    %6 = vector.extract_strided_slice %5 {offsets = [0, 0], sizes = [1, 32], strides = [1, 1]} : vector<6x32xf32> to vector<1x32xf32>
    %7 = vector.extract_strided_slice %5 {offsets = [1, 0], sizes = [1, 32], strides = [1, 1]} : vector<6x32xf32> to vector<1x32xf32>
    %8 = vector.extract_strided_slice %5 {offsets = [2, 0], sizes = [1, 32], strides = [1, 1]} : vector<6x32xf32> to vector<1x32xf32>
    %9 = vector.extract_strided_slice %5 {offsets = [3, 0], sizes = [1, 32], strides = [1, 1]} : vector<6x32xf32> to vector<1x32xf32>
    %10 = vector.extract_strided_slice %5 {offsets = [4, 0], sizes = [1, 32], strides = [1, 1]} : vector<6x32xf32> to vector<1x32xf32>
    %11 = vector.extract_strided_slice %5 {offsets = [5, 0], sizes = [1, 32], strides = [1, 1]} : vector<6x32xf32> to vector<1x32xf32>
    %12 = arith.truncf %3 : vector<16x32xf32> to vector<16x32xbf16>
    %c0_5 = arith.constant 0 : index
    %c0_6 = arith.constant 0 : index
    %c0_7 = arith.constant 0 : index
    %13 = vector.load %arg2[%c0_5, %c0_6, %c0_7] : memref<1x32x96xbf16, #tpu.memory_space<vmem>>, vector<1x32x96xbf16>
    %14 = vector.shape_cast %13 : vector<1x32x96xbf16> to vector<32x96xbf16>
    %cst = arith.constant dense<0.000000e+00> : vector<16x96xf32>
    %15 = tpu.matmul %12, %14, %cst {dimension_numbers = #tpu.dot_dimension_numbers<[1], [0], [0], [1], [0, 0, 1, 1], [], []>} : vector<16x32xbf16>, vector<32x96xbf16>, vector<16x96xf32> -> vector<16x96xf32>
    %c0_8 = arith.constant 0 : index
    %c0_9 = arith.constant 0 : index
    %c0_10 = arith.constant 0 : index
    %16 = vector.load %arg7[%c0_8, %c0_9, %c0_10] : memref<1x1x96xf32, #tpu.memory_space<vmem>>, vector<1x1x96xf32>
    %17 = vector.shape_cast %16 : vector<1x1x96xf32> to vector<1x96xf32>
    %18 = vector.broadcast %17 : vector<1x96xf32> to vector<16x96xf32>
    %19 = arith.addf %15, %18 : vector<16x96xf32>
    %20 = vector.extract_strided_slice %19 {offsets = [0, 0], sizes = [16, 8], strides = [1, 1]} : vector<16x96xf32> to vector<16x8xf32>
    %21 = vector.shape_cast %20 : vector<16x8xf32> to vector<2x8x8xf32>
    %22 = vector.extract_strided_slice %19 {offsets = [0, 8], sizes = [16, 8], strides = [1, 1]} : vector<16x96xf32> to vector<16x8xf32>
    %23 = vector.shape_cast %22 : vector<16x8xf32> to vector<2x8x8xf32>
    %24 = vector.extract_strided_slice %19 {offsets = [0, 16], sizes = [16, 8], strides = [1, 1]} : vector<16x96xf32> to vector<16x8xf32>
    %25 = vector.shape_cast %24 : vector<16x8xf32> to vector<2x8x8xf32>
    %26 = vector.extract_strided_slice %19 {offsets = [0, 24], sizes = [16, 8], strides = [1, 1]} : vector<16x96xf32> to vector<16x8xf32>
    %27 = vector.shape_cast %26 : vector<16x8xf32> to vector<2x8x8xf32>
    %28 = vector.shape_cast %21 : vector<2x8x8xf32> to vector<1x2x8x8xf32>
    %29 = vector.shape_cast %23 : vector<2x8x8xf32> to vector<1x2x8x8xf32>
    %30 = vector.shape_cast %25 : vector<2x8x8xf32> to vector<1x2x8x8xf32>
    %31 = vector.shape_cast %27 : vector<2x8x8xf32> to vector<1x2x8x8xf32>
    %32 = tpu.concatenate %28, %29, %30, %31 in 0 : vector<1x2x8x8xf32>, vector<1x2x8x8xf32>, vector<1x2x8x8xf32>, vector<1x2x8x8xf32> -> vector<4x2x8x8xf32>
    %33 = vector.shape_cast %32 : vector<4x2x8x8xf32> to vector<8x8x8xf32>
    %34 = arith.truncf %33 : vector<8x8x8xf32> to vector<8x8x8xbf16>
    %35 = vector.extract_strided_slice %19 {offsets = [0, 32], sizes = [16, 8], strides = [1, 1]} : vector<16x96xf32> to vector<16x8xf32>
    %36 = vector.shape_cast %35 : vector<16x8xf32> to vector<2x8x8xf32>
    %37 = vector.extract_strided_slice %19 {offsets = [0, 40], sizes = [16, 8], strides = [1, 1]} : vector<16x96xf32> to vector<16x8xf32>
    %38 = vector.shape_cast %37 : vector<16x8xf32> to vector<2x8x8xf32>
    %39 = vector.extract_strided_slice %19 {offsets = [0, 48], sizes = [16, 8], strides = [1, 1]} : vector<16x96xf32> to vector<16x8xf32>
    %40 = vector.shape_cast %39 : vector<16x8xf32> to vector<2x8x8xf32>
    %41 = vector.extract_strided_slice %19 {offsets = [0, 56], sizes = [16, 8], strides = [1, 1]} : vector<16x96xf32> to vector<16x8xf32>
    %42 = vector.shape_cast %41 : vector<16x8xf32> to vector<2x8x8xf32>
    %43 = vector.shape_cast %36 : vector<2x8x8xf32> to vector<1x2x8x8xf32>
    %44 = vector.shape_cast %38 : vector<2x8x8xf32> to vector<1x2x8x8xf32>
    %45 = vector.shape_cast %40 : vector<2x8x8xf32> to vector<1x2x8x8xf32>
    %46 = vector.shape_cast %42 : vector<2x8x8xf32> to vector<1x2x8x8xf32>
    %47 = tpu.concatenate %43, %44, %45, %46 in 0 : vector<1x2x8x8xf32>, vector<1x2x8x8xf32>, vector<1x2x8x8xf32>, vector<1x2x8x8xf32> -> vector<4x2x8x8xf32>
    %48 = vector.shape_cast %47 : vector<4x2x8x8xf32> to vector<8x8x8xf32>
    %49 = arith.truncf %48 : vector<8x8x8xf32> to vector<8x8x8xbf16>
    %50 = vector.extract_strided_slice %19 {offsets = [0, 64], sizes = [16, 8], strides = [1, 1]} : vector<16x96xf32> to vector<16x8xf32>
    %51 = vector.shape_cast %50 : vector<16x8xf32> to vector<2x8x8xf32>
    %52 = vector.extract_strided_slice %19 {offsets = [0, 72], sizes = [16, 8], strides = [1, 1]} : vector<16x96xf32> to vector<16x8xf32>
    %53 = vector.shape_cast %52 : vector<16x8xf32> to vector<2x8x8xf32>
    %54 = vector.extract_strided_slice %19 {offsets = [0, 80], sizes = [16, 8], strides = [1, 1]} : vector<16x96xf32> to vector<16x8xf32>
    %55 = vector.shape_cast %54 : vector<16x8xf32> to vector<2x8x8xf32>
    %56 = vector.extract_strided_slice %19 {offsets = [0, 88], sizes = [16, 8], strides = [1, 1]} : vector<16x96xf32> to vector<16x8xf32>
    %57 = vector.shape_cast %56 : vector<16x8xf32> to vector<2x8x8xf32>
    %58 = vector.shape_cast %51 : vector<2x8x8xf32> to vector<1x2x8x8xf32>
    %59 = vector.shape_cast %53 : vector<2x8x8xf32> to vector<1x2x8x8xf32>
    %60 = vector.shape_cast %55 : vector<2x8x8xf32> to vector<1x2x8x8xf32>
    %61 = vector.shape_cast %57 : vector<2x8x8xf32> to vector<1x2x8x8xf32>
    %62 = tpu.concatenate %58, %59, %60, %61 in 0 : vector<1x2x8x8xf32>, vector<1x2x8x8xf32>, vector<1x2x8x8xf32>, vector<1x2x8x8xf32> -> vector<4x2x8x8xf32>
    %63 = vector.shape_cast %62 : vector<4x2x8x8xf32> to vector<8x8x8xf32>
    %64 = arith.truncf %63 : vector<8x8x8xf32> to vector<8x8x8xbf16>
    "tpu.trace_start"() <{level = 10 : i32, message = "hqd,hkd->hqk"}> : () -> ()
    %cst_11 = arith.constant dense<0.000000e+00> : vector<8x8x8xf32>
    %65 = tpu.matmul %34, %49, %cst_11 {dimension_numbers = #tpu.dot_dimension_numbers<[2], [2], [1], [1], [0, 0, 0, 1, 1, 1], [0], [0]>} : vector<8x8x8xbf16>, vector<8x8x8xbf16>, vector<8x8x8xf32> -> vector<8x8x8xf32>
    "tpu.trace_stop"() : () -> ()
    %cst_12 = arith.constant dense<0xFF800000> : vector<8x8xf32>
    %66 = vector.multi_reduction <maximumf>, %65, %cst_12 [2] : vector<8x8x8xf32> to vector<8x8xf32>
    %67 = vector.shape_cast %66 : vector<8x8xf32> to vector<8x8x1xf32>
    %68 = vector.broadcast %67 : vector<8x8x1xf32> to vector<8x8x8xf32>
    %69 = arith.subf %65, %68 : vector<8x8x8xf32>
    %70 = math.exp %69 : vector<8x8x8xf32>
    %cst_13 = arith.constant dense<0.000000e+00> : vector<8x8xf32>
    %71 = vector.multi_reduction <add>, %70, %cst_13 [2] : vector<8x8x8xf32> to vector<8x8xf32>
    %72 = vector.shape_cast %71 : vector<8x8xf32> to vector<8x8x1xf32>
    %73 = tpu.reciprocal %72 {approx = true} : vector<8x8x1xf32> -> vector<8x8x1xf32>
    %74 = vector.broadcast %73 : vector<8x8x1xf32> to vector<8x8x8xf32>
    %75 = arith.mulf %70, %74 : vector<8x8x8xf32>
    %76 = arith.truncf %75 : vector<8x8x8xf32> to vector<8x8x8xbf16>
    "tpu.trace_start"() <{level = 10 : i32, message = "hqk,hkd->hqd"}> : () -> ()
    %cst_14 = arith.constant dense<0.000000e+00> : vector<8x8x8xf32>
    %77 = tpu.matmul %76, %64, %cst_14 {dimension_numbers = #tpu.dot_dimension_numbers<[2], [1], [1], [2], [0, 0, 0, 1, 1, 2], [0], [0]>} : vector<8x8x8xbf16>, vector<8x8x8xbf16>, vector<8x8x8xf32> -> vector<8x8x8xf32>
    "tpu.trace_stop"() : () -> ()
    %78 = vector.shape_cast %77 : vector<8x8x8xf32> to vector<4x2x8x8xf32>
    %79 = vector.extract_strided_slice %78 {offsets = [0, 0, 0, 0], sizes = [1, 2, 8, 8], strides = [1, 1, 1, 1]} : vector<4x2x8x8xf32> to vector<1x2x8x8xf32>
    %80 = vector.shape_cast %79 : vector<1x2x8x8xf32> to vector<2x8x8xf32>
    %81 = vector.shape_cast %80 : vector<2x8x8xf32> to vector<16x8xf32>
    %82 = vector.extract_strided_slice %78 {offsets = [1, 0, 0, 0], sizes = [1, 2, 8, 8], strides = [1, 1, 1, 1]} : vector<4x2x8x8xf32> to vector<1x2x8x8xf32>
    %83 = vector.shape_cast %82 : vector<1x2x8x8xf32> to vector<2x8x8xf32>
    %84 = vector.shape_cast %83 : vector<2x8x8xf32> to vector<16x8xf32>
    %85 = vector.extract_strided_slice %78 {offsets = [2, 0, 0, 0], sizes = [1, 2, 8, 8], strides = [1, 1, 1, 1]} : vector<4x2x8x8xf32> to vector<1x2x8x8xf32>
    %86 = vector.shape_cast %85 : vector<1x2x8x8xf32> to vector<2x8x8xf32>
    %87 = vector.shape_cast %86 : vector<2x8x8xf32> to vector<16x8xf32>
    %88 = vector.extract_strided_slice %78 {offsets = [3, 0, 0, 0], sizes = [1, 2, 8, 8], strides = [1, 1, 1, 1]} : vector<4x2x8x8xf32> to vector<1x2x8x8xf32>
    %89 = vector.shape_cast %88 : vector<1x2x8x8xf32> to vector<2x8x8xf32>
    %90 = vector.shape_cast %89 : vector<2x8x8xf32> to vector<16x8xf32>
    %91 = tpu.concatenate %81, %84, %87, %90 in 1 : vector<16x8xf32>, vector<16x8xf32>, vector<16x8xf32>, vector<16x8xf32> -> vector<16x32xf32>
    %92 = arith.truncf %91 : vector<16x32xf32> to vector<16x32xbf16>
    %c0_15 = arith.constant 0 : index
    %c0_16 = arith.constant 0 : index
    %c0_17 = arith.constant 0 : index
    %93 = vector.load %arg3[%c0_15, %c0_16, %c0_17] : memref<1x32x32xbf16, #tpu.memory_space<vmem>>, vector<1x32x32xbf16>
    %94 = vector.shape_cast %93 : vector<1x32x32xbf16> to vector<32x32xbf16>
    %cst_18 = arith.constant dense<0.000000e+00> : vector<16x32xf32>
    %95 = tpu.matmul %92, %94, %cst_18 {dimension_numbers = #tpu.dot_dimension_numbers<[1], [0], [0], [1], [0, 0, 1, 1], [], []>} : vector<16x32xbf16>, vector<32x32xbf16>, vector<16x32xf32> -> vector<16x32xf32>
    %96 = vector.broadcast %6 : vector<1x32xf32> to vector<16x32xf32>
    %97 = arith.addf %95, %96 : vector<16x32xf32>
    %98 = arith.addf %3, %97 : vector<16x32xf32>
    %cst_19 = arith.constant dense<0.000000e+00> : vector<16xf32>
    %99 = vector.multi_reduction <add>, %98, %cst_19 [1] : vector<16x32xf32> to vector<16xf32>
    %100 = vector.shape_cast %99 : vector<16xf32> to vector<16x1xf32>
    %cst_20 = arith.constant 3.200000e+01 : f32
    %101 = vector.broadcast %cst_20 : f32 to vector<16x1xf32>
    %102 = arith.divf %100, %101 : vector<16x1xf32>
    %103 = vector.broadcast %102 : vector<16x1xf32> to vector<16x32xf32>
    %104 = arith.subf %98, %103 : vector<16x32xf32>
    %105 = vector.broadcast %102 : vector<16x1xf32> to vector<16x32xf32>
    %106 = arith.subf %98, %105 : vector<16x32xf32>
    %107 = arith.mulf %104, %106 : vector<16x32xf32>
    %cst_21 = arith.constant dense<0.000000e+00> : vector<16xf32>
    %108 = vector.multi_reduction <add>, %107, %cst_21 [1] : vector<16x32xf32> to vector<16xf32>
    %109 = vector.shape_cast %108 : vector<16xf32> to vector<16x1xf32>
    %cst_22 = arith.constant 3.200000e+01 : f32
    %110 = vector.broadcast %cst_22 : f32 to vector<16x1xf32>
    %111 = arith.divf %109, %110 : vector<16x1xf32>
    %112 = vector.broadcast %102 : vector<16x1xf32> to vector<16x32xf32>
    %113 = arith.subf %98, %112 : vector<16x32xf32>
    %cst_23 = arith.constant 9.99999974E-6 : f32
    %114 = vector.broadcast %cst_23 : f32 to vector<16x1xf32>
    %115 = arith.addf %111, %114 : vector<16x1xf32>
    %116 = math.rsqrt %115 : vector<16x1xf32>
    %117 = vector.broadcast %116 : vector<16x1xf32> to vector<16x32xf32>
    %118 = arith.mulf %113, %117 : vector<16x32xf32>
    %119 = vector.broadcast %7 : vector<1x32xf32> to vector<16x32xf32>
    %120 = arith.mulf %118, %119 : vector<16x32xf32>
    %121 = vector.broadcast %8 : vector<1x32xf32> to vector<16x32xf32>
    %122 = arith.addf %120, %121 : vector<16x32xf32>
    %123 = arith.truncf %122 : vector<16x32xf32> to vector<16x32xbf16>
    %cst_24 = arith.constant 0.000000e+00 : f32
    %124 = vector.broadcast %cst_24 : f32 to vector<16x32xf32>
    %c0_i32_25 = arith.constant 0 : i32
    %c0_26 = arith.constant 0 : index
    %125 = arith.index_cast %c0_i32_25 : i32 to index
    %c0_27 = arith.constant 0 : index
    %c0_28 = arith.constant 0 : index
    %126 = vector.load %arg4[%c0_26, %125, %c0_27, %c0_28] : memref<1x4x32x512xbf16, #tpu.memory_space<vmem>>, vector<1x1x32x512xbf16>
    %127 = vector.shape_cast %126 : vector<1x1x32x512xbf16> to vector<32x512xbf16>
    %c0_29 = arith.constant 0 : index
    %128 = arith.index_cast %c0_i32_25 : i32 to index
    %c0_30 = arith.constant 0 : index
    %c0_31 = arith.constant 0 : index
    %129 = vector.load %arg5[%c0_29, %128, %c0_30, %c0_31] : memref<1x4x1x512xbf16, #tpu.memory_space<vmem>>, vector<1x1x1x512xbf16>
    %130 = vector.shape_cast %129 : vector<1x1x1x512xbf16> to vector<1x512xbf16>
    %cst_32 = arith.constant dense<0.000000e+00> : vector<16x512xf32>
    %131 = tpu.matmul %123, %127, %cst_32 {dimension_numbers = #tpu.dot_dimension_numbers<[1], [0], [0], [1], [0, 0, 1, 1], [], []>} : vector<16x32xbf16>, vector<32x512xbf16>, vector<16x512xf32> -> vector<16x512xf32>
    %132 = arith.extf %130 : vector<1x512xbf16> to vector<1x512xf32>
    %133 = vector.broadcast %132 : vector<1x512xf32> to vector<16x512xf32>
    %134 = arith.addf %131, %133 : vector<16x512xf32>
    %cst_33 = arith.constant 0.000000e+00 : f32
    %135 = vector.broadcast %cst_33 : f32 to vector<16x512xf32>
    %136 = arith.maximumf %134, %135 : vector<16x512xf32>
    %137 = arith.truncf %136 : vector<16x512xf32> to vector<16x512xbf16>
    %c0_34 = arith.constant 0 : index
    %138 = arith.index_cast %c0_i32_25 : i32 to index
    %c0_35 = arith.constant 0 : index
    %c0_36 = arith.constant 0 : index
    %139 = vector.load %arg6[%c0_34, %138, %c0_35, %c0_36] : memref<1x4x512x32xbf16, #tpu.memory_space<vmem>>, vector<1x1x512x32xbf16>
    %140 = vector.shape_cast %139 : vector<1x1x512x32xbf16> to vector<512x32xbf16>
    %cst_37 = arith.constant dense<0.000000e+00> : vector<16x32xf32>
    %141 = tpu.matmul %137, %140, %cst_37 {dimension_numbers = #tpu.dot_dimension_numbers<[1], [0], [0], [1], [0, 0, 1, 1], [], []>} : vector<16x512xbf16>, vector<512x32xbf16>, vector<16x32xf32> -> vector<16x32xf32>
    %142 = arith.addf %124, %141 : vector<16x32xf32>
    %c1_i32 = arith.constant 1 : i32
    %c0_38 = arith.constant 0 : index
    %143 = arith.index_cast %c1_i32 : i32 to index
    %c0_39 = arith.constant 0 : index
    %c0_40 = arith.constant 0 : index
    %144 = vector.load %arg4[%c0_38, %143, %c0_39, %c0_40] : memref<1x4x32x512xbf16, #tpu.memory_space<vmem>>, vector<1x1x32x512xbf16>
    %145 = vector.shape_cast %144 : vector<1x1x32x512xbf16> to vector<32x512xbf16>
    %c0_41 = arith.constant 0 : index
    %146 = arith.index_cast %c1_i32 : i32 to index
    %c0_42 = arith.constant 0 : index
    %c0_43 = arith.constant 0 : index
    %147 = vector.load %arg5[%c0_41, %146, %c0_42, %c0_43] : memref<1x4x1x512xbf16, #tpu.memory_space<vmem>>, vector<1x1x1x512xbf16>
    %148 = vector.shape_cast %147 : vector<1x1x1x512xbf16> to vector<1x512xbf16>
    %cst_44 = arith.constant dense<0.000000e+00> : vector<16x512xf32>
    %149 = tpu.matmul %123, %145, %cst_44 {dimension_numbers = #tpu.dot_dimension_numbers<[1], [0], [0], [1], [0, 0, 1, 1], [], []>} : vector<16x32xbf16>, vector<32x512xbf16>, vector<16x512xf32> -> vector<16x512xf32>
    %150 = arith.extf %148 : vector<1x512xbf16> to vector<1x512xf32>
    %151 = vector.broadcast %150 : vector<1x512xf32> to vector<16x512xf32>
    %152 = arith.addf %149, %151 : vector<16x512xf32>
    %cst_45 = arith.constant 0.000000e+00 : f32
    %153 = vector.broadcast %cst_45 : f32 to vector<16x512xf32>
    %154 = arith.maximumf %152, %153 : vector<16x512xf32>
    %155 = arith.truncf %154 : vector<16x512xf32> to vector<16x512xbf16>
    %c0_46 = arith.constant 0 : index
    %156 = arith.index_cast %c1_i32 : i32 to index
    %c0_47 = arith.constant 0 : index
    %c0_48 = arith.constant 0 : index
    %157 = vector.load %arg6[%c0_46, %156, %c0_47, %c0_48] : memref<1x4x512x32xbf16, #tpu.memory_space<vmem>>, vector<1x1x512x32xbf16>
    %158 = vector.shape_cast %157 : vector<1x1x512x32xbf16> to vector<512x32xbf16>
    %cst_49 = arith.constant dense<0.000000e+00> : vector<16x32xf32>
    %159 = tpu.matmul %155, %158, %cst_49 {dimension_numbers = #tpu.dot_dimension_numbers<[1], [0], [0], [1], [0, 0, 1, 1], [], []>} : vector<16x512xbf16>, vector<512x32xbf16>, vector<16x32xf32> -> vector<16x32xf32>
    %160 = arith.addf %142, %159 : vector<16x32xf32>
    %c2_i32 = arith.constant 2 : i32
    %c0_50 = arith.constant 0 : index
    %161 = arith.index_cast %c2_i32 : i32 to index
    %c0_51 = arith.constant 0 : index
    %c0_52 = arith.constant 0 : index
    %162 = vector.load %arg4[%c0_50, %161, %c0_51, %c0_52] : memref<1x4x32x512xbf16, #tpu.memory_space<vmem>>, vector<1x1x32x512xbf16>
    %163 = vector.shape_cast %162 : vector<1x1x32x512xbf16> to vector<32x512xbf16>
    %c0_53 = arith.constant 0 : index
    %164 = arith.index_cast %c2_i32 : i32 to index
    %c0_54 = arith.constant 0 : index
    %c0_55 = arith.constant 0 : index
    %165 = vector.load %arg5[%c0_53, %164, %c0_54, %c0_55] : memref<1x4x1x512xbf16, #tpu.memory_space<vmem>>, vector<1x1x1x512xbf16>
    %166 = vector.shape_cast %165 : vector<1x1x1x512xbf16> to vector<1x512xbf16>
    %cst_56 = arith.constant dense<0.000000e+00> : vector<16x512xf32>
    %167 = tpu.matmul %123, %163, %cst_56 {dimension_numbers = #tpu.dot_dimension_numbers<[1], [0], [0], [1], [0, 0, 1, 1], [], []>} : vector<16x32xbf16>, vector<32x512xbf16>, vector<16x512xf32> -> vector<16x512xf32>
    %168 = arith.extf %166 : vector<1x512xbf16> to vector<1x512xf32>
    %169 = vector.broadcast %168 : vector<1x512xf32> to vector<16x512xf32>
    %170 = arith.addf %167, %169 : vector<16x512xf32>
    %cst_57 = arith.constant 0.000000e+00 : f32
    %171 = vector.broadcast %cst_57 : f32 to vector<16x512xf32>
    %172 = arith.maximumf %170, %171 : vector<16x512xf32>
    %173 = arith.truncf %172 : vector<16x512xf32> to vector<16x512xbf16>
    %c0_58 = arith.constant 0 : index
    %174 = arith.index_cast %c2_i32 : i32 to index
    %c0_59 = arith.constant 0 : index
    %c0_60 = arith.constant 0 : index
    %175 = vector.load %arg6[%c0_58, %174, %c0_59, %c0_60] : memref<1x4x512x32xbf16, #tpu.memory_space<vmem>>, vector<1x1x512x32xbf16>
    %176 = vector.shape_cast %175 : vector<1x1x512x32xbf16> to vector<512x32xbf16>
    %cst_61 = arith.constant dense<0.000000e+00> : vector<16x32xf32>
    %177 = tpu.matmul %173, %176, %cst_61 {dimension_numbers = #tpu.dot_dimension_numbers<[1], [0], [0], [1], [0, 0, 1, 1], [], []>} : vector<16x512xbf16>, vector<512x32xbf16>, vector<16x32xf32> -> vector<16x32xf32>
    %178 = arith.addf %160, %177 : vector<16x32xf32>
    %c3_i32 = arith.constant 3 : i32
    %c0_62 = arith.constant 0 : index
    %179 = arith.index_cast %c3_i32 : i32 to index
    %c0_63 = arith.constant 0 : index
    %c0_64 = arith.constant 0 : index
    %180 = vector.load %arg4[%c0_62, %179, %c0_63, %c0_64] : memref<1x4x32x512xbf16, #tpu.memory_space<vmem>>, vector<1x1x32x512xbf16>
    %181 = vector.shape_cast %180 : vector<1x1x32x512xbf16> to vector<32x512xbf16>
    %c0_65 = arith.constant 0 : index
    %182 = arith.index_cast %c3_i32 : i32 to index
    %c0_66 = arith.constant 0 : index
    %c0_67 = arith.constant 0 : index
    %183 = vector.load %arg5[%c0_65, %182, %c0_66, %c0_67] : memref<1x4x1x512xbf16, #tpu.memory_space<vmem>>, vector<1x1x1x512xbf16>
    %184 = vector.shape_cast %183 : vector<1x1x1x512xbf16> to vector<1x512xbf16>
    %cst_68 = arith.constant dense<0.000000e+00> : vector<16x512xf32>
    %185 = tpu.matmul %123, %181, %cst_68 {dimension_numbers = #tpu.dot_dimension_numbers<[1], [0], [0], [1], [0, 0, 1, 1], [], []>} : vector<16x32xbf16>, vector<32x512xbf16>, vector<16x512xf32> -> vector<16x512xf32>
    %186 = arith.extf %184 : vector<1x512xbf16> to vector<1x512xf32>
    %187 = vector.broadcast %186 : vector<1x512xf32> to vector<16x512xf32>
    %188 = arith.addf %185, %187 : vector<16x512xf32>
    %cst_69 = arith.constant 0.000000e+00 : f32
    %189 = vector.broadcast %cst_69 : f32 to vector<16x512xf32>
    %190 = arith.maximumf %188, %189 : vector<16x512xf32>
    %191 = arith.truncf %190 : vector<16x512xf32> to vector<16x512xbf16>
    %c0_70 = arith.constant 0 : index
    %192 = arith.index_cast %c3_i32 : i32 to index
    %c0_71 = arith.constant 0 : index
    %c0_72 = arith.constant 0 : index
    %193 = vector.load %arg6[%c0_70, %192, %c0_71, %c0_72] : memref<1x4x512x32xbf16, #tpu.memory_space<vmem>>, vector<1x1x512x32xbf16>
    %194 = vector.shape_cast %193 : vector<1x1x512x32xbf16> to vector<512x32xbf16>
    %cst_73 = arith.constant dense<0.000000e+00> : vector<16x32xf32>
    %195 = tpu.matmul %191, %194, %cst_73 {dimension_numbers = #tpu.dot_dimension_numbers<[1], [0], [0], [1], [0, 0, 1, 1], [], []>} : vector<16x512xbf16>, vector<512x32xbf16>, vector<16x32xf32> -> vector<16x32xf32>
    %196 = arith.addf %178, %195 : vector<16x32xf32>
    %c4_i32 = arith.constant 4 : i32
    %197 = vector.broadcast %9 : vector<1x32xf32> to vector<16x32xf32>
    %198 = arith.addf %196, %197 : vector<16x32xf32>
    %199 = arith.addf %122, %198 : vector<16x32xf32>
    %cst_74 = arith.constant dense<0.000000e+00> : vector<16xf32>
    %200 = vector.multi_reduction <add>, %199, %cst_74 [1] : vector<16x32xf32> to vector<16xf32>
    %201 = vector.shape_cast %200 : vector<16xf32> to vector<16x1xf32>
    %cst_75 = arith.constant 3.200000e+01 : f32
    %202 = vector.broadcast %cst_75 : f32 to vector<16x1xf32>
    %203 = arith.divf %201, %202 : vector<16x1xf32>
    %204 = vector.broadcast %203 : vector<16x1xf32> to vector<16x32xf32>
    %205 = arith.subf %199, %204 : vector<16x32xf32>
    %206 = vector.broadcast %203 : vector<16x1xf32> to vector<16x32xf32>
    %207 = arith.subf %199, %206 : vector<16x32xf32>
    %208 = arith.mulf %205, %207 : vector<16x32xf32>
    %cst_76 = arith.constant dense<0.000000e+00> : vector<16xf32>
    %209 = vector.multi_reduction <add>, %208, %cst_76 [1] : vector<16x32xf32> to vector<16xf32>
    %210 = vector.shape_cast %209 : vector<16xf32> to vector<16x1xf32>
    %cst_77 = arith.constant 3.200000e+01 : f32
    %211 = vector.broadcast %cst_77 : f32 to vector<16x1xf32>
    %212 = arith.divf %210, %211 : vector<16x1xf32>
    %213 = vector.broadcast %203 : vector<16x1xf32> to vector<16x32xf32>
    %214 = arith.subf %199, %213 : vector<16x32xf32>
    %cst_78 = arith.constant 9.99999974E-6 : f32
    %215 = vector.broadcast %cst_78 : f32 to vector<16x1xf32>
    %216 = arith.addf %212, %215 : vector<16x1xf32>
    %217 = math.rsqrt %216 : vector<16x1xf32>
    %218 = vector.broadcast %217 : vector<16x1xf32> to vector<16x32xf32>
    %219 = arith.mulf %214, %218 : vector<16x32xf32>
    %220 = vector.broadcast %10 : vector<1x32xf32> to vector<16x32xf32>
    %221 = arith.mulf %219, %220 : vector<16x32xf32>
    %222 = vector.broadcast %11 : vector<1x32xf32> to vector<16x32xf32>
    %223 = arith.addf %221, %222 : vector<16x32xf32>
    %c0_79 = arith.constant 0 : index
    %c0_80 = arith.constant 0 : index
    %224 = vector.load %arg10[%c0_79, %c0_80] : memref<16x32xf32, #tpu.memory_space<vmem>>, vector<16x32xf32>
    tpu.vector_store %arg10[%c0_79, %c0_80], %223 {strides = array<i32>} : memref<16x32xf32, #tpu.memory_space<vmem>>, vector<16x32xf32>,
    %c1_i32_81 = arith.constant 1 : i32
    %225 = arith.cmpi eq, %arg0, %c1_i32_81 : i32
    %226 = arith.extui %225 : i1 to i32
    %c0_i32_82 = arith.constant 0 : i32
    %227 = arith.cmpi ne, %226, %c0_i32_82 : i32
    scf.if %227 {
      %c0_83 = arith.constant 0 : index
      %c0_84 = arith.constant 0 : index
      %228 = vector.load %arg9[%c0_83, %c0_84] : memref<16x32xf32, #tpu.memory_space<vmem>>, vector<16x32xf32>
      tpu.vector_store %arg9[%c0_83, %c0_84], %223 {strides = array<i32>} : memref<16x32xf32, #tpu.memory_space<vmem>>, vector<16x32xf32>,
    } else {
    }
    return
  }
  func.func @transform_0(%arg0: i32) -> (i32, i32) {
    %c0_i32 = arith.constant 0 : i32
    %c0_i32_0 = arith.constant 0 : i32
    %c0_i32_1 = arith.constant 0 : i32
    return %c0_i32, %c0_i32_0 : i32, i32
  }
  func.func @transform_1(%arg0: i32) -> (i32, i32, i32) {
    %c0_i32 = arith.constant 0 : i32
    %c0_i32_0 = arith.constant 0 : i32
    %c0_i32_1 = arith.constant 0 : i32
    return %arg0, %c0_i32, %c0_i32_0 : i32, i32, i32
  }
  func.func @transform_2(%arg0: i32) -> (i32, i32, i32) {
    %c0_i32 = arith.constant 0 : i32
    %c0_i32_0 = arith.constant 0 : i32
    %c0_i32_1 = arith.constant 0 : i32
    return %arg0, %c0_i32, %c0_i32_0 : i32, i32, i32
  }
  func.func @transform_3(%arg0: i32) -> (i32, i32, i32, i32) {
    %c0_i32 = arith.constant 0 : i32
    %c0_i32_0 = arith.constant 0 : i32
    %c0_i32_1 = arith.constant 0 : i32
    %c0_i32_2 = arith.constant 0 : i32
    return %arg0, %c0_i32, %c0_i32_0, %c0_i32_1 : i32, i32, i32, i32
  }
  func.func @transform_4(%arg0: i32) -> (i32, i32, i32, i32) {
    %c0_i32 = arith.constant 0 : i32
    %c0_i32_0 = arith.constant 0 : i32
    %c0_i32_1 = arith.constant 0 : i32
    %c0_i32_2 = arith.constant 0 : i32
    return %arg0, %c0_i32, %c0_i32_0, %c0_i32_1 : i32, i32, i32, i32
  }
  func.func @transform_5(%arg0: i32) -> (i32, i32, i32, i32) {
    %c0_i32 = arith.constant 0 : i32
    %c0_i32_0 = arith.constant 0 : i32
    %c0_i32_1 = arith.constant 0 : i32
    %c0_i32_2 = arith.constant 0 : i32
    return %arg0, %c0_i32, %c0_i32_0, %c0_i32_1 : i32, i32, i32, i32
  }
  func.func @transform_6(%arg0: i32) -> (i32, i32, i32) {
    %c0_i32 = arith.constant 0 : i32
    %c0_i32_0 = arith.constant 0 : i32
    %c0_i32_1 = arith.constant 0 : i32
    return %arg0, %c0_i32, %c0_i32_0 : i32, i32, i32
  }
  func.func @transform_7(%arg0: i32) -> (i32, i32, i32) {
    %c0_i32 = arith.constant 0 : i32
    %c0_i32_0 = arith.constant 0 : i32
    %c0_i32_1 = arith.constant 0 : i32
    return %arg0, %c0_i32, %c0_i32_0 : i32, i32, i32
  }
  func.func @transform_8(%arg0: i32) -> (i32, i32) {
    %c0_i32 = arith.constant 0 : i32
    %c0_i32_0 = arith.constant 0 : i32
    %c0_i32_1 = arith.constant 0 : i32
    return %c0_i32, %c0_i32_0 : i32, i32
  }
}

</mosaic_0001>

<llo_original>
// kernel: tpu_custom_call.1
$region0: #{tpu_custom_call.1}
  #allocation0 [shape = 'u32[]', space=smem, size = 0x4, offset = 0x4, fixed_abs, tag = 'smem constant byte address 0x4 - core index']
  #allocation1 [shape = 'u32[72,128]{1,0:T(1,128)}', space=vmem, size = 0x9000, scoped, tag = 'internal scratch']
  #allocation2 [shape = 'f32[16,32]{1,0:T(8,128)}', space=vmem, size = 0x2000, scoped, tag = 'scratch operand']
  %s0 = inlined_call_operand.vmem [shape: f32[16,32], index: 0, kind: input, shape index: {}]
  %s1 = inlined_call_operand.vmem [shape: bf16[2,32,96], index: 1, kind: input, shape index: {}]
  %s2 = inlined_call_operand.vmem [shape: bf16[2,32,32], index: 2, kind: input, shape index: {}]
  %s3 = inlined_call_operand.vmem [shape: bf16[2,4,32,512], index: 3, kind: input, shape index: {}]
  %s4 = inlined_call_operand.vmem [shape: bf16[2,4,1,512], index: 4, kind: input, shape index: {}]
  %s5 = inlined_call_operand.vmem [shape: bf16[2,4,512,32], index: 5, kind: input, shape index: {}]
  %s6 = inlined_call_operand.vmem [shape: f32[2,1,96], index: 6, kind: input, shape index: {}]
  %s7 = inlined_call_operand.vmem [shape: f32[2,6,32], index: 7, kind: input, shape index: {}]
  %s8 = inlined_call_operand.hbm [shape: f32[16,32], index: 8, kind: output, shape index: {}]
  %s9 = sld [smem:[#allocation0]]
  $region73: #{tpu_custom_call.1} parent=0
    _
  %s11 = ssub.s32 1, %s9
  %s12 = scalar_select 0, %s11, %s9
  $region1: #{tpu_custom_call.1} parent=0
    #allocation3 [shape = 'u8[8192]{0}', space=vmem, size = 0x2000, scoped, tag = 'output window, operand 0, single buffered']
    #allocation4 [shape = 's32[2]{0}', space=sflag, size = 0x8, scoped, tag = 'scoped memory for tpu_custom_call.1']
    %13 = vsyncpa [#allocation4], 0
    loop: start=0, step=1, limit=4
    $region2: #{tpu_custom_call.1} parent=1 // loop_pre_header
      _
    $region3: #{tpu_custom_call.1} parent=1 // loop_header
      %s15 = sphi 0, %s19
      %p16 = scmp.ge.s32.totalorder %s15, 4
      %s23 = sphi 0, %s23
      %s25 = sphi 0, %s23
      %s26 = sphi 0, %s25
      %s40 = sphi 0, %s26
      %s46 = sphi 0, %s48
      %s49 = sphi 0, %s46
      %s50 = sphi 0, %s49
      %s66 = sphi 0, %s50
      %s72 = sphi 0, %s74
      %s75 = sphi 0, %s72
      %s76 = sphi 0, %s75
      %s92 = sphi 0, %s76
      %s98 = sphi 0, %s100
      %s101 = sphi 0, %s98
      %s102 = sphi 0, %s101
      %s118 = sphi 0, %s102
      %s124 = sphi 0, %s126
      %s127 = sphi 0, %s124
      %s128 = sphi 0, %s127
      %s144 = sphi 0, %s128
      %s150 = sphi 0, %s152
      %s153 = sphi 0, %s150
      %s154 = sphi 0, %s153
      %s170 = sphi 0, %s154
      %s176 = sphi 0, %s178
      %s179 = sphi 0, %s176
      %s180 = sphi 0, %s179
      %s196 = sphi 0, %s180
      %s202 = sphi 0, %s204
      %s205 = sphi 0, %s202
      %s206 = sphi 0, %s205
      %s222 = sphi 0, %s206
      %s226 = sphi 0, %s226
      %s228 = sphi 0, %s226
      %s229 = sphi 0, %s228
      %s243 = sphi 0, %s229
    $region4: #{tpu_custom_call.1} parent=1 // loop_header_branch
      %18 = sbr.rel (%p16) target = $region8
    $region5: #{tpu_custom_call.1} parent=1 // loop_body
      %s20 = ssub.s32 %s15, 1
      %s21 = ssub.s32 %s15, 2
      %s22 = sadd.s32 %s15, 1
      %s24 = sadd.s32 %s23, 1
      %p27 = scmp.eq.s32.totalorder %s15, 1
      %p28 = scmp.ne.s32.totalorder %s23, %s25
      %p29 = scmp.eq.s32.totalorder %s15, 0
      %p30 = por %p28, %p29
      %p31 = scmp.ne.s32.totalorder %s23, %s25
      %p32 = scmp.eq.s32.totalorder %s20, 1
      %p33 = por %p31, %p32
      %p34 = scmp.ne.s32.totalorder %s25, %s26
      %p35 = scmp.eq.s32.totalorder %s20, 0
      %p36 = por %p34, %p35
      %p37 = scmp.ne.s32.totalorder %s25, %s26
      %p38 = scmp.eq.s32.totalorder %s21, 1
      %p39 = por %p37, %p38
      %p41 = scmp.ne.s32.totalorder %s26, %s40
      %p42 = scmp.eq.s32.totalorder %s21, 0
      %p43 = por %p41, %p42
      %s44 = ssub.s32 %s15, %s22
      %p45 = scmp.eq.s32.totalorder %s44, 0
      %s47 = sadd.s32 %s46, 1
      %s48 = scalar_select %p45, %s46, %s47
      %p51 = pneg %p45
      %p52 = scmp.eq.s32.totalorder %s15, 1
      %p53 = por %p51, %p52
      %p54 = scmp.ne.s32.totalorder %s46, %s49
      %p55 = scmp.eq.s32.totalorder %s15, 0
      %p56 = por %p54, %p55
      %p57 = scmp.ne.s32.totalorder %s46, %s49
      %p58 = scmp.eq.s32.totalorder %s20, 1
      %p59 = por %p57, %p58
      %p60 = scmp.ne.s32.totalorder %s49, %s50
      %p61 = scmp.eq.s32.totalorder %s20, 0
      %p62 = por %p60, %p61
      %p63 = scmp.ne.s32.totalorder %s49, %s50
      %p64 = scmp.eq.s32.totalorder %s21, 1
      %p65 = por %p63, %p64
      %p67 = scmp.ne.s32.totalorder %s50, %s66
      %p68 = scmp.eq.s32.totalorder %s21, 0
      %p69 = por %p67, %p68
      %s70 = ssub.s32 %s15, %s22
      %p71 = scmp.eq.s32.totalorder %s70, 0
      %s73 = sadd.s32 %s72, 1
      %s74 = scalar_select %p71, %s72, %s73
      %p77 = pneg %p71
      %p78 = scmp.eq.s32.totalorder %s15, 1
      %p79 = por %p77, %p78
      %p80 = scmp.ne.s32.totalorder %s72, %s75
      %p81 = scmp.eq.s32.totalorder %s15, 0
      %p82 = por %p80, %p81
      %p83 = scmp.ne.s32.totalorder %s72, %s75
      %p84 = scmp.eq.s32.totalorder %s20, 1
      %p85 = por %p83, %p84
      %p86 = scmp.ne.s32.totalorder %s75, %s76
      %p87 = scmp.eq.s32.totalorder %s20, 0
      %p88 = por %p86, %p87
      %p89 = scmp.ne.s32.totalorder %s75, %s76
      %p90 = scmp.eq.s32.totalorder %s21, 1
      %p91 = por %p89, %p90
      %p93 = scmp.ne.s32.totalorder %s76, %s92
      %p94 = scmp.eq.s32.totalorder %s21, 0
      %p95 = por %p93, %p94
      %s96 = ssub.s32 %s15, %s22
      %p97 = scmp.eq.s32.totalorder %s96, 0
      %s99 = sadd.s32 %s98, 1
      %s100 = scalar_select %p97, %s98, %s99
      %p103 = pneg %p97
      %p104 = scmp.eq.s32.totalorder %s15, 1
      %p105 = por %p103, %p104
      %p106 = scmp.ne.s32.totalorder %s98, %s101
      %p107 = scmp.eq.s32.totalorder %s15, 0
      %p108 = por %p106, %p107
      %p109 = scmp.ne.s32.totalorder %s98, %s101
      %p110 = scmp.eq.s32.totalorder %s20, 1
      %p111 = por %p109, %p110
      %p112 = scmp.ne.s32.totalorder %s101, %s102
      %p113 = scmp.eq.s32.totalorder %s20, 0
      %p114 = por %p112, %p113
      %p115 = scmp.ne.s32.totalorder %s101, %s102
      %p116 = scmp.eq.s32.totalorder %s21, 1
      %p117 = por %p115, %p116
      %p119 = scmp.ne.s32.totalorder %s102, %s118
      %p120 = scmp.eq.s32.totalorder %s21, 0
      %p121 = por %p119, %p120
      %s122 = ssub.s32 %s15, %s22
      %p123 = scmp.eq.s32.totalorder %s122, 0
      %s125 = sadd.s32 %s124, 1
      %s126 = scalar_select %p123, %s124, %s125
      %p129 = pneg %p123
      %p130 = scmp.eq.s32.totalorder %s15, 1
      %p131 = por %p129, %p130
      %p132 = scmp.ne.s32.totalorder %s124, %s127
      %p133 = scmp.eq.s32.totalorder %s15, 0
      %p134 = por %p132, %p133
      %p135 = scmp.ne.s32.totalorder %s124, %s127
      %p136 = scmp.eq.s32.totalorder %s20, 1
      %p137 = por %p135, %p136
      %p138 = scmp.ne.s32.totalorder %s127, %s128
      %p139 = scmp.eq.s32.totalorder %s20, 0
      %p140 = por %p138, %p139
      %p141 = scmp.ne.s32.totalorder %s127, %s128
      %p142 = scmp.eq.s32.totalorder %s21, 1
      %p143 = por %p141, %p142
      %p145 = scmp.ne.s32.totalorder %s128, %s144
      %p146 = scmp.eq.s32.totalorder %s21, 0
      %p147 = por %p145, %p146
      %s148 = ssub.s32 %s15, %s22
      %p149 = scmp.eq.s32.totalorder %s148, 0
      %s151 = sadd.s32 %s150, 1
      %s152 = scalar_select %p149, %s150, %s151
      %p155 = pneg %p149
      %p156 = scmp.eq.s32.totalorder %s15, 1
      %p157 = por %p155, %p156
      %p158 = scmp.ne.s32.totalorder %s150, %s153
      %p159 = scmp.eq.s32.totalorder %s15, 0
      %p160 = por %p158, %p159
      %p161 = scmp.ne.s32.totalorder %s150, %s153
      %p162 = scmp.eq.s32.totalorder %s20, 1
      %p163 = por %p161, %p162
      %p164 = scmp.ne.s32.totalorder %s153, %s154
      %p165 = scmp.eq.s32.totalorder %s20, 0
      %p166 = por %p164, %p165
      %p167 = scmp.ne.s32.totalorder %s153, %s154
      %p168 = scmp.eq.s32.totalorder %s21, 1
      %p169 = por %p167, %p168
      %p171 = scmp.ne.s32.totalorder %s154, %s170
      %p172 = scmp.eq.s32.totalorder %s21, 0
      %p173 = por %p171, %p172
      %s174 = ssub.s32 %s15, %s22
      %p175 = scmp.eq.s32.totalorder %s174, 0
      %s177 = sadd.s32 %s176, 1
      %s178 = scalar_select %p175, %s176, %s177
      %p181 = pneg %p175
      %p182 = scmp.eq.s32.totalorder %s15, 1
      %p183 = por %p181, %p182
      %p184 = scmp.ne.s32.totalorder %s176, %s179
      %p185 = scmp.eq.s32.totalorder %s15, 0
      %p186 = por %p184, %p185
      %p187 = scmp.ne.s32.totalorder %s176, %s179
      %p188 = scmp.eq.s32.totalorder %s20, 1
      %p189 = por %p187, %p188
      %p190 = scmp.ne.s32.totalorder %s179, %s180
      %p191 = scmp.eq.s32.totalorder %s20, 0
      %p192 = por %p190, %p191
      %p193 = scmp.ne.s32.totalorder %s179, %s180
      %p194 = scmp.eq.s32.totalorder %s21, 1
      %p195 = por %p193, %p194
      %p197 = scmp.ne.s32.totalorder %s180, %s196
      %p198 = scmp.eq.s32.totalorder %s21, 0
      %p199 = por %p197, %p198
      %s200 = ssub.s32 %s15, %s22
      %p201 = scmp.eq.s32.totalorder %s200, 0
      %s203 = sadd.s32 %s202, 1
      %s204 = scalar_select %p201, %s202, %s203
      %p207 = pneg %p201
      %p208 = scmp.eq.s32.totalorder %s15, 1
      %p209 = por %p207, %p208
      %p210 = scmp.ne.s32.totalorder %s202, %s205
      %p211 = scmp.eq.s32.totalorder %s15, 0
      %p212 = por %p210, %p211
      %p213 = scmp.ne.s32.totalorder %s202, %s205
      %p214 = scmp.eq.s32.totalorder %s20, 1
      %p215 = por %p213, %p214
      %p216 = scmp.ne.s32.totalorder %s205, %s206
      %p217 = scmp.eq.s32.totalorder %s20, 0
      %p218 = por %p216, %p217
      %p219 = scmp.ne.s32.totalorder %s205, %s206
      %p220 = scmp.eq.s32.totalorder %s21, 1
      %p221 = por %p219, %p220
      %p223 = scmp.ne.s32.totalorder %s206, %s222
      %p224 = scmp.eq.s32.totalorder %s21, 0
      %p225 = por %p223, %p224
      %s227 = sadd.s32 %s226, 1
      %p230 = scmp.eq.s32.totalorder %s15, 1
      %p231 = scmp.ne.s32.totalorder %s226, %s228
      %p232 = scmp.eq.s32.totalorder %s15, 0
      %p233 = por %p231, %p232
      %p234 = scmp.ne.s32.totalorder %s226, %s228
      %p235 = scmp.eq.s32.totalorder %s20, 1
      %p236 = por %p234, %p235
      %p237 = scmp.ne.s32.totalorder %s228, %s229
      %p238 = scmp.eq.s32.totalorder %s20, 0
      %p239 = por %p237, %p238
      %p240 = scmp.ne.s32.totalorder %s228, %s229
      %p241 = scmp.eq.s32.totalorder %s21, 1
      %p242 = por %p240, %p241
      %p244 = scmp.ne.s32.totalorder %s229, %s243
      %p245 = scmp.eq.s32.totalorder %s21, 0
      %p246 = por %p244, %p245
      %p247 = scmp.le.s32.totalorder 1, %s15
      %p248 = scmp.lt.s32.totalorder %s15, 3
      %p249 = pnand %p247, %p248
      %p250 = pneg %p249
      // Predicated region
      $region9: #{tpu_custom_call.1} parent=5 // pred_check
        _
      $region10: #{tpu_custom_call.1} parent=5 // pred_check_branch
        %252 = sbr.rel (%p249) target = $region12
      $region11: #{tpu_custom_call.1} parent=5 // pred_region
        %s253 = ssub.s32 %s15, 1
        // Predicated region
        $region13: #{tpu_custom_call.1} parent=11 // pred_check
          %p254 = pneg %p36
        $region14: #{tpu_custom_call.1} parent=11 // pred_check_branch
          %256 = sbr.rel (%p254) target = $region16
        $region15: #{tpu_custom_call.1} parent=11 // pred_region
          _
        $region16: #{tpu_custom_call.1} parent=11 // pred_fallthru
          _
      $region12: #{tpu_custom_call.1} parent=5 // pred_fallthru
        _
      %p257 = scmp.lt.s32.totalorder %s15, 2
      // Predicated region
      $region17: #{tpu_custom_call.1} parent=5 // pred_check
        %p258 = pneg %p257
      $region18: #{tpu_custom_call.1} parent=5 // pred_check_branch
        %260 = sbr.rel (%p258) target = $region20
      $region19: #{tpu_custom_call.1} parent=5 // pred_region
        // Predicated region
        $region21: #{tpu_custom_call.1} parent=19 // pred_check
          %p261 = pneg %p56
        $region22: #{tpu_custom_call.1} parent=19 // pred_check_branch
          %263 = sbr.rel (%p261) target = $region24
        $region23: #{tpu_custom_call.1} parent=19 // pred_region
          %p264 = scmp.lt.s32.totalorder %s15, 1
          %s265 = scalar_select %p264, %s15, 1
          %s266 = smul.addr %s265, 4
          %s267 = smul.addr %s266, 4
          %s268 = scalar_lea.vmem %s1, %s267
        $region24: #{tpu_custom_call.1} parent=19 // pred_fallthru
          _
        // Predicated region
        $region25: #{tpu_custom_call.1} parent=19 // pred_check
          %p269 = pneg %p82
        $region26: #{tpu_custom_call.1} parent=19 // pred_check_branch
          %271 = sbr.rel (%p269) target = $region28
        $region27: #{tpu_custom_call.1} parent=19 // pred_region
          %p272 = scmp.lt.s32.totalorder %s15, 1
          %s273 = scalar_select %p272, %s15, 1
          %s274 = smul.addr %s273, 4
          %s275 = smul.addr %s274, 4
          %s276 = scalar_lea.vmem %s2, %s275
        $region28: #{tpu_custom_call.1} parent=19 // pred_fallthru
          _
        // Predicated region
        $region29: #{tpu_custom_call.1} parent=19 // pred_check
          %p277 = pneg %p108
        $region30: #{tpu_custom_call.1} parent=19 // pred_check_branch
          %279 = sbr.rel (%p277) target = $region32
        $region31: #{tpu_custom_call.1} parent=19 // pred_region
          %p280 = scmp.lt.s32.totalorder %s15, 1
          %s281 = scalar_select %p280, %s15, 1
          %s282 = smul.addr %s281, 64
          %s283 = smul.addr %s282, 4
          %s284 = scalar_lea.vmem %s3, %s283
        $region32: #{tpu_custom_call.1} parent=19 // pred_fallthru
          _
        // Predicated region
        $region33: #{tpu_custom_call.1} parent=19 // pred_check
          %p285 = pneg %p134
        $region34: #{tpu_custom_call.1} parent=19 // pred_check_branch
          %287 = sbr.rel (%p285) target = $region36
        $region35: #{tpu_custom_call.1} parent=19 // pred_region
          %p288 = scmp.lt.s32.totalorder %s15, 1
          %s289 = scalar_select %p288, %s15, 1
          %s290 = smul.addr %s289, 16
          %s291 = scalar_lea.vmem %s4, %s290
        $region36: #{tpu_custom_call.1} parent=19 // pred_fallthru
          _
        // Predicated region
        $region37: #{tpu_custom_call.1} parent=19 // pred_check
          %p292 = pneg %p160
        $region38: #{tpu_custom_call.1} parent=19 // pred_check_branch
          %294 = sbr.rel (%p292) target = $region40
        $region39: #{tpu_custom_call.1} parent=19 // pred_region
          %p295 = scmp.lt.s32.totalorder %s15, 1
          %s296 = scalar_select %p295, %s15, 1
          %s297 = smul.addr %s296, 256
          %s298 = smul.addr %s297, 4
          %s299 = scalar_lea.vmem %s5, %s298
        $region40: #{tpu_custom_call.1} parent=19 // pred_fallthru
          _
        // Predicated region
        $region41: #{tpu_custom_call.1} parent=19 // pred_check
          %p300 = pneg %p186
        $region42: #{tpu_custom_call.1} parent=19 // pred_check_branch
          %302 = sbr.rel (%p300) target = $region44
        $region43: #{tpu_custom_call.1} parent=19 // pred_region
          %p303 = scmp.lt.s32.totalorder %s15, 1
          %s304 = scalar_select %p303, %s15, 1
          %s305 = scalar_lea.vmem %s6, %s304
        $region44: #{tpu_custom_call.1} parent=19 // pred_fallthru
          _
        // Predicated region
        $region45: #{tpu_custom_call.1} parent=19 // pred_check
          %p306 = pneg %p212
        $region46: #{tpu_custom_call.1} parent=19 // pred_check_branch
          %308 = sbr.rel (%p306) target = $region48
        $region47: #{tpu_custom_call.1} parent=19 // pred_region
          %p309 = scmp.lt.s32.totalorder %s15, 1
          %s310 = scalar_select %p309, %s15, 1
          %s311 = smul.addr %s310, 8
          %s312 = scalar_lea.vmem %s7, %s311
        $region48: #{tpu_custom_call.1} parent=19 // pred_fallthru
          _
      $region20: #{tpu_custom_call.1} parent=5 // pred_fallthru
        _
      %p313 = scmp.le.s32.totalorder 1, %s15
      %p314 = scmp.lt.s32.totalorder %s15, 3
      %p315 = pnand %p313, %p314
      %p316 = pneg %p315
      // Predicated region
      $region49: #{tpu_custom_call.1} parent=5 // pred_check
        _
      $region50: #{tpu_custom_call.1} parent=5 // pred_check_branch
        %318 = sbr.rel (%p315) target = $region52
      $region51: #{tpu_custom_call.1} parent=5 // pred_region
        %s319 = ssub.s32 %s15, 1
        %p320 = pneg %p36
        %p321 = pneg %p33
        %p322 = scmp.lt.s32.totalorder %s20, 1
        %s323 = scalar_select %p322, %s20, 1
        %s324 = smul.addr %s323, 4
        %s325 = smul.addr %s324, 4
        %s326 = scalar_lea.vmem %s1, %s325
        %p327 = pneg %p62
        %p328 = pneg %p59
        %p329 = scmp.lt.s32.totalorder %s20, 1
        %s330 = scalar_select %p329, %s20, 1
        %s331 = smul.addr %s330, 4
        %s332 = smul.addr %s331, 4
        %s333 = scalar_lea.vmem %s2, %s332
        %p334 = pneg %p88
        %p335 = pneg %p85
        %p336 = scmp.lt.s32.totalorder %s20, 1
        %s337 = scalar_select %p336, %s20, 1
        %s338 = smul.addr %s337, 64
        %s339 = smul.addr %s338, 4
        %s340 = scalar_lea.vmem %s3, %s339
        %p341 = pneg %p114
        %p342 = pneg %p111
        %p343 = scmp.lt.s32.totalorder %s20, 1
        %s344 = scalar_select %p343, %s20, 1
        %s345 = smul.addr %s344, 16
        %s346 = scalar_lea.vmem %s4, %s345
        %p347 = pneg %p140
        %p348 = pneg %p137
        %p349 = scmp.lt.s32.totalorder %s20, 1
        %s350 = scalar_select %p349, %s20, 1
        %s351 = smul.addr %s350, 256
        %s352 = smul.addr %s351, 4
        %s353 = scalar_lea.vmem %s5, %s352
        %p354 = pneg %p166
        %p355 = pneg %p163
        %p356 = scmp.lt.s32.totalorder %s20, 1
        %s357 = scalar_select %p356, %s20, 1
        %s358 = scalar_lea.vmem %s6, %s357
        %p359 = pneg %p192
        %p360 = pneg %p189
        %p361 = scmp.lt.s32.totalorder %s20, 1
        %s362 = scalar_select %p361, %s20, 1
        %s363 = smul.addr %s362, 8
        %s364 = scalar_lea.vmem %s7, %s363
        %p365 = pneg %p218
        %p366 = pneg %p215
        %p367 = pneg %p239
        %p368 = pneg %p236
        %p369 = scmp.lt.s32.totalorder %s20, 1
        %s370 = scalar_select %p369, %s20, 1
        %s371 = smul.addr %s370, 4
        %s372 = smul.addr %s371, 4
        %s373 = scalar_lea.vmem %s1, %s372
        %p374 = scmp.lt.s32.totalorder %s20, 1
        %s375 = scalar_select %p374, %s20, 1
        %s376 = smul.addr %s375, 4
        %s377 = smul.addr %s376, 4
        %s378 = scalar_lea.vmem %s2, %s377
        %p379 = scmp.lt.s32.totalorder %s20, 1
        %s380 = scalar_select %p379, %s20, 1
        %s381 = smul.addr %s380, 64
        %s382 = smul.addr %s381, 4
        %s383 = scalar_lea.vmem %s3, %s382
        %p384 = scmp.lt.s32.totalorder %s20, 1
        %s385 = scalar_select %p384, %s20, 1
        %s386 = smul.addr %s385, 16
        %s387 = scalar_lea.vmem %s4, %s386
        %p388 = scmp.lt.s32.totalorder %s20, 1
        %s389 = scalar_select %p388, %s20, 1
        %s390 = smul.addr %s389, 256
        %s391 = smul.addr %s390, 4
        %s392 = scalar_lea.vmem %s5, %s391
        %p393 = scmp.lt.s32.totalorder %s20, 1
        %s394 = scalar_select %p393, %s20, 1
        %s395 = scalar_lea.vmem %s6, %s394
        %p396 = scmp.lt.s32.totalorder %s20, 1
        %s397 = scalar_select %p396, %s20, 1
        %s398 = smul.addr %s397, 8
        %s399 = scalar_lea.vmem %s7, %s398
        %p401 = scmp.eq.s32.totalorder %s20, 0
        // Predicated region
        $region53: #{tpu_custom_call.1} parent=51 // pred_check
          %p402 = pneg %p401
        $region54: #{tpu_custom_call.1} parent=51 // pred_check_branch
          %404 = sbr.rel (%p402) target = $region56
        $region55: #{tpu_custom_call.1} parent=51 // pred_region
          %v405 = vld [vmem:[%s0] sm:$0xff]
          %v406 = vld [vmem:[%s0 + $0x8] sm:$0xff]
          %vm407 = vcmask 261120
          %408 = vst.msk [vmem:[#allocation2] sm:$0xff] %vm407, %v405
          %409 = vst.msk [vmem:[#allocation2 + $0x8] sm:$0xff] %vm407, %v406
        $region56: #{tpu_custom_call.1} parent=51 // pred_fallthru
          _
        %v410 = vld [vmem:[#allocation2] sm:$0xff]
        %v411 = vld [vmem:[#allocation2 + $0x8] sm:$0xff]
        %v412 = vld [vmem:[%s399] sm:$0x3f]
        %v413 = vpack.c.bf16 %v411, %v410
        %v414 = vld [vmem:[%s373] sm:$0xf]
        %v415 = vld [vmem:[%s373 + $0x4] sm:$0xf]
        %v416 = vld [vmem:[%s373 + $0x8] sm:$0xf]
        %v417 = vld [vmem:[%s373 + $0xc] sm:$0xf]
        %v418 = vld [vmem:[%s395] sm:$0x1]
        %v420 = vperm.slane %v418, 0
        %v426 = vunpack.c.l.b16 %v414
        %v427 = vunpack.c.l.b16 %v415
        %v428 = vunpack.c.l.b16 %v416
        %v429 = vunpack.c.l.b16 %v417
        %v430 = vpack.c.b16 %v427, %v426
        %v431 = vpack.c.b16 %v429, %v428
        %vm434 = vcmask 261120
        %v436 = vsel %vm434, %v413, 0
        %438 = vmatpush.bf16.msra.mxu0 0
        %439 = vmatpush.bf16.msra.mxu0 0
        %440 = vmatpush.bf16.msra.mxu0 0
        %441 = vmatpush.bf16.msra.mxu0 0
        %442 = vmatpush.bf16.msra.mxu0 0
        %443 = vmatpush.bf16.msra.mxu0 0
        %444 = vmatpush.bf16.msra.mxu0 %v431
        %445 = vmatpush.bf16.msra.mxu0 %v430
        %446 = vmatmul.bf16.gmra.mxu0 %v436
        %v447 = vpop.f32.mrf.mxu0
        %v448 = vadd.f32 %v420, %v447
        %v449 = vpop.f32.mrf.mxu0
        %v450 = vadd.f32 %v420, %v449
        %451 = vdwg.mxu0
        %454 = vrot.lane.b32.xlu0 %v448, 120
        %v455 = vpop.permute.xlu0 %454
        %456 = vrot.lane.b32.xlu0 %v450, 120
        %v457 = vpop.permute.xlu0 %456
        %460 = vrot.lane.b32.xlu0 %v448, 112
        %v461 = vpop.permute.xlu0 %460
        %462 = vrot.lane.b32.xlu0 %v450, 112
        %v463 = vpop.permute.xlu0 %462
        %466 = vrot.lane.b32.xlu0 %v448, 104
        %v467 = vpop.permute.xlu0 %466
        %468 = vrot.lane.b32.xlu0 %v450, 104
        %v469 = vpop.permute.xlu0 %468
        %v472 = vpack.c.bf16 %v448, %v448
        %v473 = vpack.c.bf16 %v450, %v450
        %v474 = vpack.c.bf16 %v455, %v455
        %v475 = vpack.c.bf16 %v457, %v457
        %v476 = vpack.c.bf16 %v461, %v461
        %v477 = vpack.c.bf16 %v463, %v463
        %v478 = vpack.c.bf16 %v467, %v467
        %v479 = vpack.c.bf16 %v469, %v469
        %v481 = vunpack.c.l.b16 %v472
        %v482 = vpack.c.b16 %v481, %v481
        %483 = vrot.lane.b32.xlu0 %v482, 96
        %v484 = vpop.permute.xlu0 %483
        %vm485 = vcmask 64512
        %v487 = vsel %vm485, %v472, 0
        %v490 = vsel %vm485, %v484, 0
        %492 = vmatpush.bf16.xpose.msra.mxu0 0
        %493 = vmatpush.bf16.xpose.msra.mxu0 0
        %494 = vmatpush.bf16.xpose.msra.mxu0 0
        %495 = vmatpush.bf16.xpose.msra.mxu0 0
        %496 = vmatpush.bf16.xpose.msra.mxu0 0
        %497 = vmatpush.bf16.xpose.msra.mxu0 0
        %498 = vmatpush.bf16.xpose.msra.mxu0 0
        %499 = vmatpush.bf16.xpose.msra.mxu0 %v490
        %500 = vmatmul.bf16.gmra.mxu0 %v487
        %v501 = vpop.f32.mrf.mxu0
        %v502 = vadd.f32 0.0, %v501
        %v503 = vpop.f32.mrf.mxu0
        %504 = vdwg.mxu0
        %v506 = vunpack.c.l.b16 %v473
        %v507 = vpack.c.b16 %v506, %v506
        %508 = vrot.lane.b32.xlu0 %v507, 96
        %v509 = vpop.permute.xlu0 %508
        %v511 = vsel %vm485, %v473, 0
        %v514 = vsel %vm485, %v509, 0
        %516 = vmatpush.bf16.xpose.msra.mxu0 0
        %517 = vmatpush.bf16.xpose.msra.mxu0 0
        %518 = vmatpush.bf16.xpose.msra.mxu0 0
        %519 = vmatpush.bf16.xpose.msra.mxu0 0
        %520 = vmatpush.bf16.xpose.msra.mxu0 0
        %521 = vmatpush.bf16.xpose.msra.mxu0 0
        %522 = vmatpush.bf16.xpose.msra.mxu0 0
        %523 = vmatpush.bf16.xpose.msra.mxu0 %v514
        %524 = vmatmul.bf16.gmra.mxu0 %v511
        %v525 = vpop.f32.mrf.mxu0
        %v526 = vadd.f32 0.0, %v525
        %v527 = vpop.f32.mrf.mxu0
        %528 = vdwg.mxu0
        %v530 = vunpack.c.l.b16 %v474
        %v531 = vpack.c.b16 %v530, %v530
        %532 = vrot.lane.b32.xlu0 %v531, 96
        %v533 = vpop.permute.xlu0 %532
        %v535 = vsel %vm485, %v474, 0
        %v538 = vsel %vm485, %v533, 0
        %540 = vmatpush.bf16.xpose.msra.mxu0 0
        %541 = vmatpush.bf16.xpose.msra.mxu0 0
        %542 = vmatpush.bf16.xpose.msra.mxu0 0
        %543 = vmatpush.bf16.xpose.msra.mxu0 0
        %544 = vmatpush.bf16.xpose.msra.mxu0 0
        %545 = vmatpush.bf16.xpose.msra.mxu0 0
        %546 = vmatpush.bf16.xpose.msra.mxu0 0
        %547 = vmatpush.bf16.xpose.msra.mxu0 %v538
        %548 = vmatmul.bf16.gmra.mxu0 %v535
        %v549 = vpop.f32.mrf.mxu0
        %v550 = vadd.f32 0.0, %v549
        %v551 = vpop.f32.mrf.mxu0
        %552 = vdwg.mxu0
        %v554 = vunpack.c.l.b16 %v475
        %v555 = vpack.c.b16 %v554, %v554
        %556 = vrot.lane.b32.xlu0 %v555, 96
        %v557 = vpop.permute.xlu0 %556
        %v559 = vsel %vm485, %v475, 0
        %v562 = vsel %vm485, %v557, 0
        %564 = vmatpush.bf16.xpose.msra.mxu0 0
        %565 = vmatpush.bf16.xpose.msra.mxu0 0
        %566 = vmatpush.bf16.xpose.msra.mxu0 0
        %567 = vmatpush.bf16.xpose.msra.mxu0 0
        %568 = vmatpush.bf16.xpose.msra.mxu0 0
        %569 = vmatpush.bf16.xpose.msra.mxu0 0
        %570 = vmatpush.bf16.xpose.msra.mxu0 0
        %571 = vmatpush.bf16.xpose.msra.mxu0 %v562
        %572 = vmatmul.bf16.gmra.mxu0 %v559
        %v573 = vpop.f32.mrf.mxu0
        %v574 = vadd.f32 0.0, %v573
        %v575 = vpop.f32.mrf.mxu0
        %576 = vdwg.mxu0
        %v578 = vunpack.c.l.b16 %v476
        %v579 = vpack.c.b16 %v578, %v578
        %580 = vrot.lane.b32.xlu0 %v579, 96
        %v581 = vpop.permute.xlu0 %580
        %v583 = vsel %vm485, %v476, 0
        %v586 = vsel %vm485, %v581, 0
        %588 = vmatpush.bf16.xpose.msra.mxu0 0
        %589 = vmatpush.bf16.xpose.msra.mxu0 0
        %590 = vmatpush.bf16.xpose.msra.mxu0 0
        %591 = vmatpush.bf16.xpose.msra.mxu0 0
        %592 = vmatpush.bf16.xpose.msra.mxu0 0
        %593 = vmatpush.bf16.xpose.msra.mxu0 0
        %594 = vmatpush.bf16.xpose.msra.mxu0 0
        %595 = vmatpush.bf16.xpose.msra.mxu0 %v586
        %596 = vmatmul.bf16.gmra.mxu0 %v583
        %v597 = vpop.f32.mrf.mxu0
        %v598 = vadd.f32 0.0, %v597
        %v599 = vpop.f32.mrf.mxu0
        %600 = vdwg.mxu0
        %v602 = vunpack.c.l.b16 %v477
        %v603 = vpack.c.b16 %v602, %v602
        %604 = vrot.lane.b32.xlu0 %v603, 96
        %v605 = vpop.permute.xlu0 %604
        %v607 = vsel %vm485, %v477, 0
        %v610 = vsel %vm485, %v605, 0
        %612 = vmatpush.bf16.xpose.msra.mxu0 0
        %613 = vmatpush.bf16.xpose.msra.mxu0 0
        %614 = vmatpush.bf16.xpose.msra.mxu0 0
        %615 = vmatpush.bf16.xpose.msra.mxu0 0
        %616 = vmatpush.bf16.xpose.msra.mxu0 0
        %617 = vmatpush.bf16.xpose.msra.mxu0 0
        %618 = vmatpush.bf16.xpose.msra.mxu0 0
        %619 = vmatpush.bf16.xpose.msra.mxu0 %v610
        %620 = vmatmul.bf16.gmra.mxu0 %v607
        %v621 = vpop.f32.mrf.mxu0
        %v622 = vadd.f32 0.0, %v621
        %v623 = vpop.f32.mrf.mxu0
        %624 = vdwg.mxu0
        %v626 = vunpack.c.l.b16 %v478
        %v627 = vpack.c.b16 %v626, %v626
        %628 = vrot.lane.b32.xlu0 %v627, 96
        %v629 = vpop.permute.xlu0 %628
        %v631 = vsel %vm485, %v478, 0
        %v634 = vsel %vm485, %v629, 0
        %636 = vmatpush.bf16.xpose.msra.mxu0 0
        %637 = vmatpush.bf16.xpose.msra.mxu0 0
        %638 = vmatpush.bf16.xpose.msra.mxu0 0
        %639 = vmatpush.bf16.xpose.msra.mxu0 0
        %640 = vmatpush.bf16.xpose.msra.mxu0 0
        %641 = vmatpush.bf16.xpose.msra.mxu0 0
        %642 = vmatpush.bf16.xpose.msra.mxu0 0
        %643 = vmatpush.bf16.xpose.msra.mxu0 %v634
        %644 = vmatmul.bf16.gmra.mxu0 %v631
        %v645 = vpop.f32.mrf.mxu0
        %v646 = vadd.f32 0.0, %v645
        %v647 = vpop.f32.mrf.mxu0
        %648 = vdwg.mxu0
        %v650 = vunpack.c.l.b16 %v479
        %v651 = vpack.c.b16 %v650, %v650
        %652 = vrot.lane.b32.xlu0 %v651, 96
        %v653 = vpop.permute.xlu0 %652
        %v655 = vsel %vm485, %v479, 0
        %v658 = vsel %vm485, %v653, 0
        %660 = vmatpush.bf16.xpose.msra.mxu0 0
        %661 = vmatpush.bf16.xpose.msra.mxu0 0
        %662 = vmatpush.bf16.xpose.msra.mxu0 0
        %663 = vmatpush.bf16.xpose.msra.mxu0 0
        %664 = vmatpush.bf16.xpose.msra.mxu0 0
        %665 = vmatpush.bf16.xpose.msra.mxu0 0
        %666 = vmatpush.bf16.xpose.msra.mxu0 0
        %667 = vmatpush.bf16.xpose.msra.mxu0 %v658
        %668 = vmatmul.bf16.gmra.mxu0 %v655
        %v669 = vpop.f32.mrf.mxu0
        %v670 = vadd.f32 0.0, %v669
        %v671 = vpop.f32.mrf.mxu0
        %672 = vdwg.mxu0
        %v673 = vsel %vm485, %v502, -inf
        %674 = vmax.xlane.f32.xlu0 %v673
        %v675 = vpop.xlane.xlu0 %674
        %v676 = vsel %vm485, %v526, -inf
        %677 = vmax.xlane.f32.xlu0 %v676
        %v678 = vpop.xlane.xlu0 %677
        %v679 = vsel %vm485, %v550, -inf
        %680 = vmax.xlane.f32.xlu0 %v679
        %v681 = vpop.xlane.xlu0 %680
        %v682 = vsel %vm485, %v574, -inf
        %683 = vmax.xlane.f32.xlu0 %v682
        %v684 = vpop.xlane.xlu0 %683
        %v685 = vsel %vm485, %v598, -inf
        %686 = vmax.xlane.f32.xlu0 %v685
        %v687 = vpop.xlane.xlu0 %686
        %v688 = vsel %vm485, %v622, -inf
        %689 = vmax.xlane.f32.xlu0 %v688
        %v690 = vpop.xlane.xlu0 %689
        %v691 = vsel %vm485, %v646, -inf
        %692 = vmax.xlane.f32.xlu0 %v691
        %v693 = vpop.xlane.xlu0 %692
        %v694 = vsel %vm485, %v670, -inf
        %695 = vmax.xlane.f32.xlu0 %v694
        %v696 = vpop.xlane.xlu0 %695
        %v697 = vsub.f32 %v502, %v675
        %v698 = vsub.f32 %v526, %v678
        %v699 = vsub.f32 %v550, %v681
        %v700 = vsub.f32 %v574, %v684
        %v701 = vsub.f32 %v598, %v687
        %v702 = vsub.f32 %v622, %v690
        %v703 = vsub.f32 %v646, %v693
        %v704 = vsub.f32 %v670, %v696
        %v705 = vmul.f32 %v697, 1.442695
        %v706 = vpow.pop %v705
        %v707 = vmul.f32 %v698, 1.442695
        %v708 = vpow.pop %v707
        %v709 = vmul.f32 %v699, 1.442695
        %v710 = vpow.pop %v709
        %v711 = vmul.f32 %v700, 1.442695
        %v712 = vpow.pop %v711
        %v713 = vmul.f32 %v701, 1.442695
        %v714 = vpow.pop %v713
        %v715 = vmul.f32 %v702, 1.442695
        %v716 = vpow.pop %v715
        %v717 = vmul.f32 %v703, 1.442695
        %v718 = vpow.pop %v717
        %v719 = vmul.f32 %v704, 1.442695
        %v720 = vpow.pop %v719
        %v721 = vsel %vm485, %v706, 0.0
        %722 = vadd.xlane.f32.xlu0 %v721
        %v723 = vpop.xlane.xlu0 %722
        %v724 = vsel %vm485, %v708, 0.0
        %725 = vadd.xlane.f32.xlu0 %v724
        %v726 = vpop.xlane.xlu0 %725
        %v727 = vsel %vm485, %v710, 0.0
        %728 = vadd.xlane.f32.xlu0 %v727
        %v729 = vpop.xlane.xlu0 %728
        %v730 = vsel %vm485, %v712, 0.0
        %731 = vadd.xlane.f32.xlu0 %v730
        %v732 = vpop.xlane.xlu0 %731
        %v733 = vsel %vm485, %v714, 0.0
        %734 = vadd.xlane.f32.xlu0 %v733
        %v735 = vpop.xlane.xlu0 %734
        %v736 = vsel %vm485, %v716, 0.0
        %737 = vadd.xlane.f32.xlu0 %v736
        %v738 = vpop.xlane.xlu0 %737
        %v739 = vsel %vm485, %v718, 0.0
        %740 = vadd.xlane.f32.xlu0 %v739
        %v741 = vpop.xlane.xlu0 %740
        %v742 = vsel %vm485, %v720, 0.0
        %743 = vadd.xlane.f32.xlu0 %v742
        %v744 = vpop.xlane.xlu0 %743
        %v745 = vrcp.pop %v723
        %v746 = vrcp.pop %v726
        %v747 = vrcp.pop %v729
        %v748 = vrcp.pop %v732
        %v749 = vrcp.pop %v735
        %v750 = vrcp.pop %v738
        %v751 = vrcp.pop %v741
        %v752 = vrcp.pop %v744
        %v753 = vmul.f32 %v706, %v745
        %v754 = vmul.f32 %v708, %v746
        %v755 = vmul.f32 %v710, %v747
        %v756 = vmul.f32 %v712, %v748
        %v757 = vmul.f32 %v714, %v749
        %v758 = vmul.f32 %v716, %v750
        %v759 = vmul.f32 %v718, %v751
        %v760 = vmul.f32 %v720, %v752
        %v761 = vpack.c.bf16 %v753, %v753
        %v762 = vpack.c.bf16 %v754, %v754
        %v763 = vpack.c.bf16 %v755, %v755
        %v764 = vpack.c.bf16 %v756, %v756
        %v765 = vpack.c.bf16 %v757, %v757
        %v766 = vpack.c.bf16 %v758, %v758
        %v767 = vpack.c.bf16 %v759, %v759
        %v768 = vpack.c.bf16 %v760, %v760
        %769 = vrot.lane.b32.xlu0 %v482, 64
        %v770 = vpop.permute.xlu0 %769
        %v772 = vsel %vm485, %v761, 0
        %vm774 = vcmask 1043456
        %v776 = vsel %vm774, %v770, 0
        %778 = vmatpush.bf16.msra.mxu0 0
        %779 = vmatpush.bf16.msra.mxu0 0
        %780 = vmatpush.bf16.msra.mxu0 0
        %781 = vmatpush.bf16.msra.mxu0 0
        %782 = vmatpush.bf16.msra.mxu0 0
        %783 = vmatpush.bf16.msra.mxu0 0
        %784 = vmatpush.bf16.msra.mxu0 0
        %785 = vmatpush.bf16.msra.mxu0 %v776
        %786 = vmatmul.bf16.gmra.mxu0 %v772
        %v787 = vpop.f32.mrf.mxu0
        %v788 = vadd.f32 0.0, %v787
        %v789 = vpop.f32.mrf.mxu0
        %790 = vdwg.mxu0
        %791 = vrot.lane.b32.xlu0 %v507, 64
        %v792 = vpop.permute.xlu0 %791
        %v794 = vsel %vm485, %v762, 0
        %v797 = vsel %vm774, %v792, 0
        %799 = vmatpush.bf16.msra.mxu0 0
        %800 = vmatpush.bf16.msra.mxu0 0
        %801 = vmatpush.bf16.msra.mxu0 0
        %802 = vmatpush.bf16.msra.mxu0 0
        %803 = vmatpush.bf16.msra.mxu0 0
        %804 = vmatpush.bf16.msra.mxu0 0
        %805 = vmatpush.bf16.msra.mxu0 0
        %806 = vmatpush.bf16.msra.mxu0 %v797
        %807 = vmatmul.bf16.gmra.mxu0 %v794
        %v808 = vpop.f32.mrf.mxu0
        %v809 = vadd.f32 0.0, %v808
        %v810 = vpop.f32.mrf.mxu0
        %811 = vdwg.mxu0
        %812 = vrot.lane.b32.xlu0 %v531, 64
        %v813 = vpop.permute.xlu0 %812
        %v815 = vsel %vm485, %v763, 0
        %v818 = vsel %vm774, %v813, 0
        %820 = vmatpush.bf16.msra.mxu0 0
        %821 = vmatpush.bf16.msra.mxu0 0
        %822 = vmatpush.bf16.msra.mxu0 0
        %823 = vmatpush.bf16.msra.mxu0 0
        %824 = vmatpush.bf16.msra.mxu0 0
        %825 = vmatpush.bf16.msra.mxu0 0
        %826 = vmatpush.bf16.msra.mxu0 0
        %827 = vmatpush.bf16.msra.mxu0 %v818
        %828 = vmatmul.bf16.gmra.mxu0 %v815
        %v829 = vpop.f32.mrf.mxu0
        %v830 = vadd.f32 0.0, %v829
        %v831 = vpop.f32.mrf.mxu0
        %832 = vdwg.mxu0
        %833 = vrot.lane.b32.xlu0 %v555, 64
        %v834 = vpop.permute.xlu0 %833
        %v836 = vsel %vm485, %v764, 0
        %v839 = vsel %vm774, %v834, 0
        %841 = vmatpush.bf16.msra.mxu0 0
        %842 = vmatpush.bf16.msra.mxu0 0
        %843 = vmatpush.bf16.msra.mxu0 0
        %844 = vmatpush.bf16.msra.mxu0 0
        %845 = vmatpush.bf16.msra.mxu0 0
        %846 = vmatpush.bf16.msra.mxu0 0
        %847 = vmatpush.bf16.msra.mxu0 0
        %848 = vmatpush.bf16.msra.mxu0 %v839
        %849 = vmatmul.bf16.gmra.mxu0 %v836
        %v850 = vpop.f32.mrf.mxu0
        %v851 = vadd.f32 0.0, %v850
        %v852 = vpop.f32.mrf.mxu0
        %853 = vdwg.mxu0
        %854 = vrot.lane.b32.xlu0 %v579, 64
        %v855 = vpop.permute.xlu0 %854
        %v857 = vsel %vm485, %v765, 0
        %v860 = vsel %vm774, %v855, 0
        %862 = vmatpush.bf16.msra.mxu0 0
        %863 = vmatpush.bf16.msra.mxu0 0
        %864 = vmatpush.bf16.msra.mxu0 0
        %865 = vmatpush.bf16.msra.mxu0 0
        %866 = vmatpush.bf16.msra.mxu0 0
        %867 = vmatpush.bf16.msra.mxu0 0
        %868 = vmatpush.bf16.msra.mxu0 0
        %869 = vmatpush.bf16.msra.mxu0 %v860
        %870 = vmatmul.bf16.gmra.mxu0 %v857
        %v871 = vpop.f32.mrf.mxu0
        %v872 = vadd.f32 0.0, %v871
        %v873 = vpop.f32.mrf.mxu0
        %874 = vdwg.mxu0
        %875 = vrot.lane.b32.xlu0 %v603, 64
        %v876 = vpop.permute.xlu0 %875
        %v878 = vsel %vm485, %v766, 0
        %v881 = vsel %vm774, %v876, 0
        %883 = vmatpush.bf16.msra.mxu0 0
        %884 = vmatpush.bf16.msra.mxu0 0
        %885 = vmatpush.bf16.msra.mxu0 0
        %886 = vmatpush.bf16.msra.mxu0 0
        %887 = vmatpush.bf16.msra.mxu0 0
        %888 = vmatpush.bf16.msra.mxu0 0
        %889 = vmatpush.bf16.msra.mxu0 0
        %890 = vmatpush.bf16.msra.mxu0 %v881
        %891 = vmatmul.bf16.gmra.mxu0 %v878
        %v892 = vpop.f32.mrf.mxu0
        %v893 = vadd.f32 0.0, %v892
        %v894 = vpop.f32.mrf.mxu0
        %895 = vdwg.mxu0
        %896 = vrot.lane.b32.xlu0 %v627, 64
        %v897 = vpop.permute.xlu0 %896
        %v899 = vsel %vm485, %v767, 0
        %v902 = vsel %vm774, %v897, 0
        %904 = vmatpush.bf16.msra.mxu0 0
        %905 = vmatpush.bf16.msra.mxu0 0
        %906 = vmatpush.bf16.msra.mxu0 0
        %907 = vmatpush.bf16.msra.mxu0 0
        %908 = vmatpush.bf16.msra.mxu0 0
        %909 = vmatpush.bf16.msra.mxu0 0
        %910 = vmatpush.bf16.msra.mxu0 0
        %911 = vmatpush.bf16.msra.mxu0 %v902
        %912 = vmatmul.bf16.gmra.mxu0 %v899
        %v913 = vpop.f32.mrf.mxu0
        %v914 = vadd.f32 0.0, %v913
        %v915 = vpop.f32.mrf.mxu0
        %916 = vdwg.mxu0
        %917 = vrot.lane.b32.xlu0 %v651, 64
        %v918 = vpop.permute.xlu0 %917
        %v920 = vsel %vm485, %v768, 0
        %v923 = vsel %vm774, %v918, 0
        %925 = vmatpush.bf16.msra.mxu0 0
        %926 = vmatpush.bf16.msra.mxu0 0
        %927 = vmatpush.bf16.msra.mxu0 0
        %928 = vmatpush.bf16.msra.mxu0 0
        %929 = vmatpush.bf16.msra.mxu0 0
        %930 = vmatpush.bf16.msra.mxu0 0
        %931 = vmatpush.bf16.msra.mxu0 0
        %932 = vmatpush.bf16.msra.mxu0 %v923
        %933 = vmatmul.bf16.gmra.mxu0 %v920
        %v934 = vpop.f32.mrf.mxu0
        %v935 = vadd.f32 0.0, %v934
        %v936 = vpop.f32.mrf.mxu0
        %937 = vdwg.mxu0
        %940 = vrot.lane.b32.xlu0 %v830, 8
        %v941 = vpop.permute.xlu0 %940
        %942 = vrot.lane.b32.xlu0 %v851, 8
        %v943 = vpop.permute.xlu0 %942
        %948 = vrot.lane.b32.xlu0 %v872, 16
        %v949 = vpop.permute.xlu0 %948
        %950 = vrot.lane.b32.xlu0 %v893, 16
        %v951 = vpop.permute.xlu0 %950
        %956 = vrot.lane.b32.xlu0 %v914, 24
        %v957 = vpop.permute.xlu0 %956
        %958 = vrot.lane.b32.xlu0 %v935, 24
        %v959 = vpop.permute.xlu0 %958
        %v962 = vsel %vm485, %v788, %v941
        %v963 = vsel %vm485, %v809, %v943
        %vm964 = vcmask 130048
        %v965 = vsel %vm964, %v962, %v949
        %v966 = vsel %vm964, %v963, %v951
        %vm967 = vcmask 195584
        %v968 = vsel %vm967, %v965, %v957
        %v969 = vsel %vm967, %v966, %v959
        %v970 = vpack.c.bf16 %v969, %v968
        %v971 = vld [vmem:[%s378] sm:$0xf]
        %v972 = vld [vmem:[%s378 + $0x4] sm:$0xf]
        %v973 = vld [vmem:[%s378 + $0x8] sm:$0xf]
        %v974 = vld [vmem:[%s378 + $0xc] sm:$0xf]
        %v975 = vperm.slane %v412, 0
        %v980 = vunpack.c.l.b16 %v971
        %v981 = vunpack.c.l.b16 %v972
        %v982 = vunpack.c.l.b16 %v973
        %v983 = vunpack.c.l.b16 %v974
        %v984 = vpack.c.b16 %v981, %v980
        %v985 = vpack.c.b16 %v983, %v982
        %v989 = vsel %vm434, %v970, 0
        %991 = vmatpush.bf16.msra.mxu0 0
        %992 = vmatpush.bf16.msra.mxu0 0
        %993 = vmatpush.bf16.msra.mxu0 0
        %994 = vmatpush.bf16.msra.mxu0 0
        %995 = vmatpush.bf16.msra.mxu0 0
        %996 = vmatpush.bf16.msra.mxu0 0
        %997 = vmatpush.bf16.msra.mxu0 %v985
        %998 = vmatpush.bf16.msra.mxu0 %v984
        %999 = vmatmul.bf16.gmra.mxu0 %v989
        %v1000 = vpop.f32.mrf.mxu0
        %v1001 = vadd.f32 %v975, %v1000
        %v1002 = vpop.f32.mrf.mxu0
        %v1003 = vadd.f32 %v975, %v1002
        %1004 = vdwg.mxu0
        %v1005 = vadd.f32 %v410, %v1001
        %v1006 = vadd.f32 %v411, %v1003
        %v1007 = vsel %vm434, %v1005, 0.0
        %1008 = vadd.xlane.f32.xlu0 %v1007
        %v1009 = vpop.xlane.xlu0 %1008
        %v1010 = vsel %vm434, %v1006, 0.0
        %1011 = vadd.xlane.f32.xlu0 %v1010
        %v1012 = vpop.xlane.xlu0 %1011
        %v1013 = vrcp.pop 32.0
        %v1014 = vmul.f32 32.0, %v1013
        %v1015 = vsub.f32 1.0, %v1014
        %v1016 = vmul.f32 %v1013, %v1015
        %v1017 = vadd.f32 %v1013, %v1016
        %vm1018 = vweird.f32 %v1013
        %v1019 = vsel %vm1018, %v1013, %v1017
        %v1020 = vmul.f32 %v1009, %v1019
        %v1021 = vmul.f32 %v1012, %v1019
        %v1022 = vsub.f32 %v1005, %v1020
        %v1023 = vsub.f32 %v1006, %v1021
        %v1024 = vmul.f32 %v1022, %v1022
        %v1025 = vmul.f32 %v1023, %v1023
        %v1026 = vsel %vm434, %v1024, 0.0
        %1027 = vadd.xlane.f32.xlu0 %v1026
        %v1028 = vpop.xlane.xlu0 %1027
        %v1029 = vsel %vm434, %v1025, 0.0
        %1030 = vadd.xlane.f32.xlu0 %v1029
        %v1031 = vpop.xlane.xlu0 %1030
        %v1032 = vmul.f32 %v1028, %v1019
        %v1033 = vmul.f32 %v1031, %v1019
        %v1034 = vadd.f32 %v1032, 1e-05
        %v1035 = vadd.f32 %v1033, 1e-05
        %v1036 = vrsqrt.pop %v1034
        %v1037 = vmul.f32 %v1036, %v1034
        %v1038 = vmul.f32 %v1037, %v1036
        %v1039 = vmul.f32 0.5, %v1038
        %v1040 = vsub.f32 1.5, %v1039
        %v1041 = vmul.f32 %v1036, %v1040
        %vm1042 = vweird.f32 %v1034
        %vm1043 = vweird.f32 %v1036
        %vm1044 = vmor %vm1042, %vm1043
        %v1045 = vsel %vm1044, %v1036, %v1041
        %v1046 = vrsqrt.pop %v1035
        %v1047 = vmul.f32 %v1046, %v1035
        %v1048 = vmul.f32 %v1047, %v1046
        %v1049 = vmul.f32 0.5, %v1048
        %v1050 = vsub.f32 1.5, %v1049
        %v1051 = vmul.f32 %v1046, %v1050
        %vm1052 = vweird.f32 %v1035
        %vm1053 = vweird.f32 %v1046
        %vm1054 = vmor %vm1052, %vm1053
        %v1055 = vsel %vm1054, %v1046, %v1051
        %v1056 = vmul.f32 %v1022, %v1045
        %v1057 = vmul.f32 %v1023, %v1055
        %v1058 = vperm.slane %v412, 1
        %v1059 = vmul.f32 %v1056, %v1058
        %v1060 = vmul.f32 %v1057, %v1058
        %v1061 = vperm.slane %v412, 2
        %v1062 = vadd.f32 %v1059, %v1061
        %v1063 = vadd.f32 %v1060, %v1061
        %v1064 = vpack.c.bf16 %v1063, %v1062
        %v1065 = vld [vmem:[%s383] sm:$0xff]
        %v1066 = vld [vmem:[%s383 + $0x8] sm:$0xff]
        %v1067 = vld [vmem:[%s383 + $0x10] sm:$0xff]
        %v1068 = vld [vmem:[%s383 + $0x18] sm:$0xff]
        %v1069 = vld [vmem:[%s383 + $0x20] sm:$0xff]
        %v1070 = vld [vmem:[%s383 + $0x28] sm:$0xff]
        %v1071 = vld [vmem:[%s383 + $0x30] sm:$0xff]
        %v1072 = vld [vmem:[%s383 + $0x38] sm:$0xff]
        %v1073 = vld [vmem:[%s387] sm:$0xf]
        %v1074 = vunpack.c.l.bf16 %v1073
        %v1076 = vperm.slane %v1074, 0
        %v1077 = vperm.slane %v1074, 2
        %v1078 = vperm.slane %v1074, 4
        %v1079 = vperm.slane %v1074, 6
        %v1084 = vperm.slane %v1076, 0
        %v1085 = vperm.slane %v1077, 0
        %v1086 = vperm.slane %v1078, 0
        %v1087 = vperm.slane %v1079, 0
        %v1096 = vunpack.c.l.b16 %v1065
        %v1097 = vunpack.c.h.b16 %v1065
        %v1098 = vunpack.c.l.b16 %v1066
        %v1099 = vunpack.c.h.b16 %v1066
        %v1100 = vunpack.c.l.b16 %v1067
        %v1101 = vunpack.c.h.b16 %v1067
        %v1102 = vunpack.c.l.b16 %v1068
        %v1103 = vunpack.c.h.b16 %v1068
        %v1104 = vunpack.c.l.b16 %v1069
        %v1105 = vunpack.c.h.b16 %v1069
        %v1106 = vunpack.c.l.b16 %v1070
        %v1107 = vunpack.c.h.b16 %v1070
        %v1108 = vunpack.c.l.b16 %v1071
        %v1109 = vunpack.c.h.b16 %v1071
        %v1110 = vunpack.c.l.b16 %v1072
        %v1111 = vunpack.c.h.b16 %v1072
        %v1112 = vpack.c.b16 %v1100, %v1096
        %v1113 = vpack.c.b16 %v1101, %v1097
        %v1114 = vpack.c.b16 %v1102, %v1098
        %v1115 = vpack.c.b16 %v1103, %v1099
        %v1116 = vpack.c.b16 %v1108, %v1104
        %v1117 = vpack.c.b16 %v1109, %v1105
        %v1118 = vpack.c.b16 %v1110, %v1106
        %v1119 = vpack.c.b16 %v1111, %v1107
        %v1129 = vsel %vm434, %v1064, 0
        %1131 = vmatpush.bf16.msra.mxu0 0
        %1132 = vmatpush.bf16.msra.mxu0 0
        %1133 = vmatpush.bf16.msra.mxu0 0
        %1134 = vmatpush.bf16.msra.mxu0 0
        %1135 = vmatpush.bf16.msra.mxu0 0
        %1136 = vmatpush.bf16.msra.mxu0 0
        %1137 = vmatpush.bf16.msra.mxu0 %v1116
        %1138 = vmatpush.bf16.msra.mxu0 %v1112
        %1139 = vmatmul.bf16.gmra.mxu0 %v1129
        %v1140 = vpop.f32.mrf.mxu0
        %v1141 = vadd.f32 %v1084, %v1140
        %v1142 = vpop.f32.mrf.mxu0
        %v1143 = vadd.f32 %v1084, %v1142
        %1144 = vdwg.mxu0
        %1145 = vmatpush.bf16.msra.mxu0 0
        %1146 = vmatpush.bf16.msra.mxu0 0
        %1147 = vmatpush.bf16.msra.mxu0 0
        %1148 = vmatpush.bf16.msra.mxu0 0
        %1149 = vmatpush.bf16.msra.mxu0 0
        %1150 = vmatpush.bf16.msra.mxu0 0
        %1151 = vmatpush.bf16.msra.mxu0 %v1117
        %1152 = vmatpush.bf16.msra.mxu0 %v1113
        %1153 = vmatmul.bf16.gmra.mxu0 %v1129
        %v1154 = vpop.f32.mrf.mxu0
        %v1155 = vadd.f32 %v1085, %v1154
        %v1156 = vpop.f32.mrf.mxu0
        %v1157 = vadd.f32 %v1085, %v1156
        %1158 = vdwg.mxu0
        %1159 = vmatpush.bf16.msra.mxu0 0
        %1160 = vmatpush.bf16.msra.mxu0 0
        %1161 = vmatpush.bf16.msra.mxu0 0
        %1162 = vmatpush.bf16.msra.mxu0 0
        %1163 = vmatpush.bf16.msra.mxu0 0
        %1164 = vmatpush.bf16.msra.mxu0 0
        %1165 = vmatpush.bf16.msra.mxu0 %v1118
        %1166 = vmatpush.bf16.msra.mxu0 %v1114
        %1167 = vmatmul.bf16.gmra.mxu0 %v1129
        %v1168 = vpop.f32.mrf.mxu0
        %v1169 = vadd.f32 %v1086, %v1168
        %v1170 = vpop.f32.mrf.mxu0
        %v1171 = vadd.f32 %v1086, %v1170
        %1172 = vdwg.mxu0
        %1173 = vmatpush.bf16.msra.mxu0 0
        %1174 = vmatpush.bf16.msra.mxu0 0
        %1175 = vmatpush.bf16.msra.mxu0 0
        %1176 = vmatpush.bf16.msra.mxu0 0
        %1177 = vmatpush.bf16.msra.mxu0 0
        %1178 = vmatpush.bf16.msra.mxu0 0
        %1179 = vmatpush.bf16.msra.mxu0 %v1119
        %1180 = vmatpush.bf16.msra.mxu0 %v1115
        %1181 = vmatmul.bf16.gmra.mxu0 %v1129
        %v1182 = vpop.f32.mrf.mxu0
        %v1183 = vadd.f32 %v1087, %v1182
        %v1184 = vpop.f32.mrf.mxu0
        %v1185 = vadd.f32 %v1087, %v1184
        %1186 = vdwg.mxu0
        %v1187 = vmax.f32 %v1141, 0.0
        %v1188 = vmax.f32 %v1155, 0.0
        %v1189 = vmax.f32 %v1169, 0.0
        %v1190 = vmax.f32 %v1183, 0.0
        %v1191 = vmax.f32 %v1143, 0.0
        %v1192 = vmax.f32 %v1157, 0.0
        %v1193 = vmax.f32 %v1171, 0.0
        %v1194 = vmax.f32 %v1185, 0.0
        %v1195 = vpack.c.bf16 %v1191, %v1187
        %v1196 = vpack.c.bf16 %v1192, %v1188
        %v1197 = vpack.c.bf16 %v1193, %v1189
        %v1198 = vpack.c.bf16 %v1194, %v1190
        %v1199 = vld [vmem:[%s392] sm:$0xf]
        %v1200 = vld [vmem:[%s392 + $0x4] sm:$0xf]
        %v1201 = vld [vmem:[%s392 + $0x8] sm:$0xf]
        %v1202 = vld [vmem:[%s392 + $0xc] sm:$0xf]
        %v1203 = vld [vmem:[%s392 + $0x10] sm:$0xf]
        %v1204 = vld [vmem:[%s392 + $0x14] sm:$0xf]
        %v1205 = vld [vmem:[%s392 + $0x18] sm:$0xf]
        %v1206 = vld [vmem:[%s392 + $0x1c] sm:$0xf]
        %v1207 = vld [vmem:[%s392 + $0x20] sm:$0xf]
        %v1208 = vld [vmem:[%s392 + $0x24] sm:$0xf]
        %v1209 = vld [vmem:[%s392 + $0x28] sm:$0xf]
        %v1210 = vld [vmem:[%s392 + $0x2c] sm:$0xf]
        %v1211 = vld [vmem:[%s392 + $0x30] sm:$0xf]
        %v1212 = vld [vmem:[%s392 + $0x34] sm:$0xf]
        %v1213 = vld [vmem:[%s392 + $0x38] sm:$0xf]
        %v1214 = vld [vmem:[%s392 + $0x3c] sm:$0xf]
        %v1215 = vld [vmem:[%s392 + $0x40] sm:$0xf]
        %v1216 = vld [vmem:[%s392 + $0x44] sm:$0xf]
        %v1217 = vld [vmem:[%s392 + $0x48] sm:$0xf]
        %v1218 = vld [vmem:[%s392 + $0x4c] sm:$0xf]
        %v1219 = vld [vmem:[%s392 + $0x50] sm:$0xf]
        %v1220 = vld [vmem:[%s392 + $0x54] sm:$0xf]
        %v1221 = vld [vmem:[%s392 + $0x58] sm:$0xf]
        %v1222 = vld [vmem:[%s392 + $0x5c] sm:$0xf]
        %v1223 = vld [vmem:[%s392 + $0x60] sm:$0xf]
        %v1224 = vld [vmem:[%s392 + $0x64] sm:$0xf]
        %v1225 = vld [vmem:[%s392 + $0x68] sm:$0xf]
        %v1226 = vld [vmem:[%s392 + $0x6c] sm:$0xf]
        %v1227 = vld [vmem:[%s392 + $0x70] sm:$0xf]
        %v1228 = vld [vmem:[%s392 + $0x74] sm:$0xf]
        %v1229 = vld [vmem:[%s392 + $0x78] sm:$0xf]
        %v1230 = vld [vmem:[%s392 + $0x7c] sm:$0xf]
        %v1231 = vld [vmem:[%s392 + $0x80] sm:$0xf]
        %v1232 = vld [vmem:[%s392 + $0x84] sm:$0xf]
        %v1233 = vld [vmem:[%s392 + $0x88] sm:$0xf]
        %v1234 = vld [vmem:[%s392 + $0x8c] sm:$0xf]
        %v1235 = vld [vmem:[%s392 + $0x90] sm:$0xf]
        %v1236 = vld [vmem:[%s392 + $0x94] sm:$0xf]
        %v1237 = vld [vmem:[%s392 + $0x98] sm:$0xf]
        %v1238 = vld [vmem:[%s392 + $0x9c] sm:$0xf]
        %v1239 = vld [vmem:[%s392 + $0xa0] sm:$0xf]
        %v1240 = vld [vmem:[%s392 + $0xa4] sm:$0xf]
        %v1241 = vld [vmem:[%s392 + $0xa8] sm:$0xf]
        %v1242 = vld [vmem:[%s392 + $0xac] sm:$0xf]
        %v1243 = vld [vmem:[%s392 + $0xb0] sm:$0xf]
        %v1244 = vld [vmem:[%s392 + $0xb4] sm:$0xf]
        %v1245 = vld [vmem:[%s392 + $0xb8] sm:$0xf]
        %v1246 = vld [vmem:[%s392 + $0xbc] sm:$0xf]
        %v1247 = vld [vmem:[%s392 + $0xc0] sm:$0xf]
        %v1248 = vld [vmem:[%s392 + $0xc4] sm:$0xf]
        %v1249 = vld [vmem:[%s392 + $0xc8] sm:$0xf]
        %v1250 = vld [vmem:[%s392 + $0xcc] sm:$0xf]
        %v1251 = vld [vmem:[%s392 + $0xd0] sm:$0xf]
        %v1252 = vld [vmem:[%s392 + $0xd4] sm:$0xf]
        %v1253 = vld [vmem:[%s392 + $0xd8] sm:$0xf]
        %v1254 = vld [vmem:[%s392 + $0xdc] sm:$0xf]
        %v1255 = vld [vmem:[%s392 + $0xe0] sm:$0xf]
        %v1256 = vld [vmem:[%s392 + $0xe4] sm:$0xf]
        %v1257 = vld [vmem:[%s392 + $0xe8] sm:$0xf]
        %v1258 = vld [vmem:[%s392 + $0xec] sm:$0xf]
        %v1259 = vld [vmem:[%s392 + $0xf0] sm:$0xf]
        %v1260 = vld [vmem:[%s392 + $0xf4] sm:$0xf]
        %v1261 = vld [vmem:[%s392 + $0xf8] sm:$0xf]
        %v1262 = vld [vmem:[%s392 + $0xfc] sm:$0xf]
        %s1263 = scalar_lea.vmem %s383, 64
        %v1264 = vld [vmem:[%s1263] sm:$0xff]
        %v1265 = vld [vmem:[%s1263 + $0x8] sm:$0xff]
        %v1266 = vld [vmem:[%s1263 + $0x10] sm:$0xff]
        %v1267 = vld [vmem:[%s1263 + $0x18] sm:$0xff]
        %v1268 = vld [vmem:[%s1263 + $0x20] sm:$0xff]
        %v1269 = vld [vmem:[%s1263 + $0x28] sm:$0xff]
        %v1270 = vld [vmem:[%s1263 + $0x30] sm:$0xff]
        %v1271 = vld [vmem:[%s1263 + $0x38] sm:$0xff]
        %s1272 = scalar_lea.vmem %s387, 4
        %v1273 = vld [vmem:[%s1272] sm:$0xf]
        %v1274 = vunpack.c.l.bf16 %v1273
        %v1276 = vperm.slane %v1274, 0
        %v1277 = vperm.slane %v1274, 2
        %v1278 = vperm.slane %v1274, 4
        %v1279 = vperm.slane %v1274, 6
        %v1284 = vperm.slane %v1276, 0
        %v1285 = vperm.slane %v1277, 0
        %v1286 = vperm.slane %v1278, 0
        %v1287 = vperm.slane %v1279, 0
        %v1296 = vunpack.c.l.b16 %v1264
        %v1297 = vunpack.c.h.b16 %v1264
        %v1298 = vunpack.c.l.b16 %v1265
        %v1299 = vunpack.c.h.b16 %v1265
        %v1300 = vunpack.c.l.b16 %v1266
        %v1301 = vunpack.c.h.b16 %v1266
        %v1302 = vunpack.c.l.b16 %v1267
        %v1303 = vunpack.c.h.b16 %v1267
        %v1304 = vunpack.c.l.b16 %v1268
        %v1305 = vunpack.c.h.b16 %v1268
        %v1306 = vunpack.c.l.b16 %v1269
        %v1307 = vunpack.c.h.b16 %v1269
        %v1308 = vunpack.c.l.b16 %v1270
        %v1309 = vunpack.c.h.b16 %v1270
        %v1310 = vunpack.c.l.b16 %v1271
        %v1311 = vunpack.c.h.b16 %v1271
        %v1312 = vpack.c.b16 %v1300, %v1296
        %v1313 = vpack.c.b16 %v1301, %v1297
        %v1314 = vpack.c.b16 %v1302, %v1298
        %v1315 = vpack.c.b16 %v1303, %v1299
        %v1316 = vpack.c.b16 %v1308, %v1304
        %v1317 = vpack.c.b16 %v1309, %v1305
        %v1318 = vpack.c.b16 %v1310, %v1306
        %v1319 = vpack.c.b16 %v1311, %v1307
        %1328 = vmatpush.bf16.msra.mxu0 0
        %1329 = vmatpush.bf16.msra.mxu0 0
        %1330 = vmatpush.bf16.msra.mxu0 0
        %1331 = vmatpush.bf16.msra.mxu0 0
        %1332 = vmatpush.bf16.msra.mxu0 0
        %1333 = vmatpush.bf16.msra.mxu0 0
        %1334 = vmatpush.bf16.msra.mxu0 %v1316
        %1335 = vmatpush.bf16.msra.mxu0 %v1312
        %1336 = vmatmul.bf16.gmra.mxu0 %v1129
        %v1337 = vpop.f32.mrf.mxu0
        %v1338 = vadd.f32 %v1284, %v1337
        %v1339 = vpop.f32.mrf.mxu0
        %v1340 = vadd.f32 %v1284, %v1339
        %1341 = vdwg.mxu0
        %1342 = vmatpush.bf16.msra.mxu0 0
        %1343 = vmatpush.bf16.msra.mxu0 0
        %1344 = vmatpush.bf16.msra.mxu0 0
        %1345 = vmatpush.bf16.msra.mxu0 0
        %1346 = vmatpush.bf16.msra.mxu0 0
        %1347 = vmatpush.bf16.msra.mxu0 0
        %1348 = vmatpush.bf16.msra.mxu0 %v1317
        %1349 = vmatpush.bf16.msra.mxu0 %v1313
        %1350 = vmatmul.bf16.gmra.mxu0 %v1129
        %v1351 = vpop.f32.mrf.mxu0
        %v1352 = vadd.f32 %v1285, %v1351
        %v1353 = vpop.f32.mrf.mxu0
        %v1354 = vadd.f32 %v1285, %v1353
        %1355 = vdwg.mxu0
        %1356 = vmatpush.bf16.msra.mxu0 0
        %1357 = vmatpush.bf16.msra.mxu0 0
        %1358 = vmatpush.bf16.msra.mxu0 0
        %1359 = vmatpush.bf16.msra.mxu0 0
        %1360 = vmatpush.bf16.msra.mxu0 0
        %1361 = vmatpush.bf16.msra.mxu0 0
        %1362 = vmatpush.bf16.msra.mxu0 %v1318
        %1363 = vmatpush.bf16.msra.mxu0 %v1314
        %1364 = vmatmul.bf16.gmra.mxu0 %v1129
        %v1365 = vpop.f32.mrf.mxu0
        %v1366 = vadd.f32 %v1286, %v1365
        %v1367 = vpop.f32.mrf.mxu0
        %v1368 = vadd.f32 %v1286, %v1367
        %1369 = vdwg.mxu0
        %1370 = vmatpush.bf16.msra.mxu0 0
        %1371 = vmatpush.bf16.msra.mxu0 0
        %1372 = vmatpush.bf16.msra.mxu0 0
        %1373 = vmatpush.bf16.msra.mxu0 0
        %1374 = vmatpush.bf16.msra.mxu0 0
        %1375 = vmatpush.bf16.msra.mxu0 0
        %1376 = vmatpush.bf16.msra.mxu0 %v1319
        %1377 = vmatpush.bf16.msra.mxu0 %v1315
        %1378 = vmatmul.bf16.gmra.mxu0 %v1129
        %v1379 = vpop.f32.mrf.mxu0
        %v1380 = vadd.f32 %v1287, %v1379
        %v1381 = vpop.f32.mrf.mxu0
        %v1382 = vadd.f32 %v1287, %v1381
        %1383 = vdwg.mxu0
        %v1384 = vmax.f32 %v1338, 0.0
        %v1385 = vmax.f32 %v1352, 0.0
        %v1386 = vmax.f32 %v1366, 0.0
        %v1387 = vmax.f32 %v1380, 0.0
        %v1388 = vmax.f32 %v1340, 0.0
        %v1389 = vmax.f32 %v1354, 0.0
        %v1390 = vmax.f32 %v1368, 0.0
        %v1391 = vmax.f32 %v1382, 0.0
        %v1392 = vpack.c.bf16 %v1388, %v1384
        %v1393 = vpack.c.bf16 %v1389, %v1385
        %v1394 = vpack.c.bf16 %v1390, %v1386
        %v1395 = vpack.c.bf16 %v1391, %v1387
        %s1396 = scalar_lea.vmem %s392, 256
        %v1397 = vld [vmem:[%s1396] sm:$0xf]
        %v1398 = vld [vmem:[%s1396 + $0x4] sm:$0xf]
        %v1399 = vld [vmem:[%s1396 + $0x8] sm:$0xf]
        %v1400 = vld [vmem:[%s1396 + $0xc] sm:$0xf]
        %v1401 = vld [vmem:[%s1396 + $0x10] sm:$0xf]
        %v1402 = vld [vmem:[%s1396 + $0x14] sm:$0xf]
        %v1403 = vld [vmem:[%s1396 + $0x18] sm:$0xf]
        %v1404 = vld [vmem:[%s1396 + $0x1c] sm:$0xf]
        %v1405 = vld [vmem:[%s1396 + $0x20] sm:$0xf]
        %v1406 = vld [vmem:[%s1396 + $0x24] sm:$0xf]
        %v1407 = vld [vmem:[%s1396 + $0x28] sm:$0xf]
        %v1408 = vld [vmem:[%s1396 + $0x2c] sm:$0xf]
        %v1409 = vld [vmem:[%s1396 + $0x30] sm:$0xf]
        %v1410 = vld [vmem:[%s1396 + $0x34] sm:$0xf]
        %v1411 = vld [vmem:[%s1396 + $0x38] sm:$0xf]
        %v1412 = vld [vmem:[%s1396 + $0x3c] sm:$0xf]
        %v1413 = vld [vmem:[%s1396 + $0x40] sm:$0xf]
        %v1414 = vld [vmem:[%s1396 + $0x44] sm:$0xf]
        %v1415 = vld [vmem:[%s1396 + $0x48] sm:$0xf]
        %v1416 = vld [vmem:[%s1396 + $0x4c] sm:$0xf]
        %v1417 = vld [vmem:[%s1396 + $0x50] sm:$0xf]
        %v1418 = vld [vmem:[%s1396 + $0x54] sm:$0xf]
        %v1419 = vld [vmem:[%s1396 + $0x58] sm:$0xf]
        %v1420 = vld [vmem:[%s1396 + $0x5c] sm:$0xf]
        %v1421 = vld [vmem:[%s1396 + $0x60] sm:$0xf]
        %v1422 = vld [vmem:[%s1396 + $0x64] sm:$0xf]
        %v1423 = vld [vmem:[%s1396 + $0x68] sm:$0xf]
        %v1424 = vld [vmem:[%s1396 + $0x6c] sm:$0xf]
        %v1425 = vld [vmem:[%s1396 + $0x70] sm:$0xf]
        %v1426 = vld [vmem:[%s1396 + $0x74] sm:$0xf]
        %v1427 = vld [vmem:[%s1396 + $0x78] sm:$0xf]
        %v1428 = vld [vmem:[%s1396 + $0x7c] sm:$0xf]
        %v1429 = vld [vmem:[%s1396 + $0x80] sm:$0xf]
        %v1430 = vld [vmem:[%s1396 + $0x84] sm:$0xf]
        %v1431 = vld [vmem:[%s1396 + $0x88] sm:$0xf]
        %v1432 = vld [vmem:[%s1396 + $0x8c] sm:$0xf]
        %v1433 = vld [vmem:[%s1396 + $0x90] sm:$0xf]
        %v1434 = vld [vmem:[%s1396 + $0x94] sm:$0xf]
        %v1435 = vld [vmem:[%s1396 + $0x98] sm:$0xf]
        %v1436 = vld [vmem:[%s1396 + $0x9c] sm:$0xf]
        %v1437 = vld [vmem:[%s1396 + $0xa0] sm:$0xf]
        %v1438 = vld [vmem:[%s1396 + $0xa4] sm:$0xf]
        %v1439 = vld [vmem:[%s1396 + $0xa8] sm:$0xf]
        %v1440 = vld [vmem:[%s1396 + $0xac] sm:$0xf]
        %v1441 = vld [vmem:[%s1396 + $0xb0] sm:$0xf]
        %v1442 = vld [vmem:[%s1396 + $0xb4] sm:$0xf]
        %v1443 = vld [vmem:[%s1396 + $0xb8] sm:$0xf]
        %v1444 = vld [vmem:[%s1396 + $0xbc] sm:$0xf]
        %v1445 = vld [vmem:[%s1396 + $0xc0] sm:$0xf]
        %v1446 = vld [vmem:[%s1396 + $0xc4] sm:$0xf]
        %v1447 = vld [vmem:[%s1396 + $0xc8] sm:$0xf]
        %v1448 = vld [vmem:[%s1396 + $0xcc] sm:$0xf]
        %v1449 = vld [vmem:[%s1396 + $0xd0] sm:$0xf]
        %v1450 = vld [vmem:[%s1396 + $0xd4] sm:$0xf]
        %v1451 = vld [vmem:[%s1396 + $0xd8] sm:$0xf]
        %v1452 = vld [vmem:[%s1396 + $0xdc] sm:$0xf]
        %v1453 = vld [vmem:[%s1396 + $0xe0] sm:$0xf]
        %v1454 = vld [vmem:[%s1396 + $0xe4] sm:$0xf]
        %v1455 = vld [vmem:[%s1396 + $0xe8] sm:$0xf]
        %v1456 = vld [vmem:[%s1396 + $0xec] sm:$0xf]
        %v1457 = vld [vmem:[%s1396 + $0xf0] sm:$0xf]
        %v1458 = vld [vmem:[%s1396 + $0xf4] sm:$0xf]
        %v1459 = vld [vmem:[%s1396 + $0xf8] sm:$0xf]
        %v1460 = vld [vmem:[%s1396 + $0xfc] sm:$0xf]
        %v1525 = vunpack.c.l.b16 %v1397
        %v1526 = vunpack.c.l.b16 %v1398
        %v1527 = vunpack.c.l.b16 %v1399
        %v1528 = vunpack.c.l.b16 %v1400
        %v1529 = vunpack.c.l.b16 %v1401
        %v1530 = vunpack.c.l.b16 %v1402
        %v1531 = vunpack.c.l.b16 %v1403
        %v1532 = vunpack.c.l.b16 %v1404
        %v1533 = vunpack.c.l.b16 %v1405
        %v1534 = vunpack.c.l.b16 %v1406
        %v1535 = vunpack.c.l.b16 %v1407
        %v1536 = vunpack.c.l.b16 %v1408
        %v1537 = vunpack.c.l.b16 %v1409
        %v1538 = vunpack.c.l.b16 %v1410
        %v1539 = vunpack.c.l.b16 %v1411
        %v1540 = vunpack.c.l.b16 %v1412
        %v1541 = vunpack.c.l.b16 %v1413
        %v1542 = vunpack.c.l.b16 %v1414
        %v1543 = vunpack.c.l.b16 %v1415
        %v1544 = vunpack.c.l.b16 %v1416
        %v1545 = vunpack.c.l.b16 %v1417
        %v1546 = vunpack.c.l.b16 %v1418
        %v1547 = vunpack.c.l.b16 %v1419
        %v1548 = vunpack.c.l.b16 %v1420
        %v1549 = vunpack.c.l.b16 %v1421
        %v1550 = vunpack.c.l.b16 %v1422
        %v1551 = vunpack.c.l.b16 %v1423
        %v1552 = vunpack.c.l.b16 %v1424
        %v1553 = vunpack.c.l.b16 %v1425
        %v1554 = vunpack.c.l.b16 %v1426
        %v1555 = vunpack.c.l.b16 %v1427
        %v1556 = vunpack.c.l.b16 %v1428
        %v1557 = vunpack.c.l.b16 %v1429
        %v1558 = vunpack.c.l.b16 %v1430
        %v1559 = vunpack.c.l.b16 %v1431
        %v1560 = vunpack.c.l.b16 %v1432
        %v1561 = vunpack.c.l.b16 %v1433
        %v1562 = vunpack.c.l.b16 %v1434
        %v1563 = vunpack.c.l.b16 %v1435
        %v1564 = vunpack.c.l.b16 %v1436
        %v1565 = vunpack.c.l.b16 %v1437
        %v1566 = vunpack.c.l.b16 %v1438
        %v1567 = vunpack.c.l.b16 %v1439
        %v1568 = vunpack.c.l.b16 %v1440
        %v1569 = vunpack.c.l.b16 %v1441
        %v1570 = vunpack.c.l.b16 %v1442
        %v1571 = vunpack.c.l.b16 %v1443
        %v1572 = vunpack.c.l.b16 %v1444
        %v1573 = vunpack.c.l.b16 %v1445
        %v1574 = vunpack.c.l.b16 %v1446
        %v1575 = vunpack.c.l.b16 %v1447
        %v1576 = vunpack.c.l.b16 %v1448
        %v1577 = vunpack.c.l.b16 %v1449
        %v1578 = vunpack.c.l.b16 %v1450
        %v1579 = vunpack.c.l.b16 %v1451
        %v1580 = vunpack.c.l.b16 %v1452
        %v1581 = vunpack.c.l.b16 %v1453
        %v1582 = vunpack.c.l.b16 %v1454
        %v1583 = vunpack.c.l.b16 %v1455
        %v1584 = vunpack.c.l.b16 %v1456
        %v1585 = vunpack.c.l.b16 %v1457
        %v1586 = vunpack.c.l.b16 %v1458
        %v1587 = vunpack.c.l.b16 %v1459
        %v1588 = vunpack.c.l.b16 %v1460
        %v1589 = vpack.c.b16 %v1526, %v1525
        %v1590 = vpack.c.b16 %v1528, %v1527
        %v1591 = vpack.c.b16 %v1530, %v1529
        %v1592 = vpack.c.b16 %v1532, %v1531
        %v1593 = vpack.c.b16 %v1534, %v1533
        %v1594 = vpack.c.b16 %v1536, %v1535
        %v1595 = vpack.c.b16 %v1538, %v1537
        %v1596 = vpack.c.b16 %v1540, %v1539
        %v1597 = vpack.c.b16 %v1542, %v1541
        %v1598 = vpack.c.b16 %v1544, %v1543
        %v1599 = vpack.c.b16 %v1546, %v1545
        %v1600 = vpack.c.b16 %v1548, %v1547
        %v1601 = vpack.c.b16 %v1550, %v1549
        %v1602 = vpack.c.b16 %v1552, %v1551
        %v1603 = vpack.c.b16 %v1554, %v1553
        %v1604 = vpack.c.b16 %v1556, %v1555
        %v1605 = vpack.c.b16 %v1558, %v1557
        %v1606 = vpack.c.b16 %v1560, %v1559
        %v1607 = vpack.c.b16 %v1562, %v1561
        %v1608 = vpack.c.b16 %v1564, %v1563
        %v1609 = vpack.c.b16 %v1566, %v1565
        %v1610 = vpack.c.b16 %v1568, %v1567
        %v1611 = vpack.c.b16 %v1570, %v1569
        %v1612 = vpack.c.b16 %v1572, %v1571
        %v1613 = vpack.c.b16 %v1574, %v1573
        %v1614 = vpack.c.b16 %v1576, %v1575
        %v1615 = vpack.c.b16 %v1578, %v1577
        %v1616 = vpack.c.b16 %v1580, %v1579
        %v1617 = vpack.c.b16 %v1582, %v1581
        %v1618 = vpack.c.b16 %v1584, %v1583
        %v1619 = vpack.c.b16 %v1586, %v1585
        %v1620 = vpack.c.b16 %v1588, %v1587
        %1653 = vmatpush.bf16.msra.mxu0 %v1596
        %1654 = vmatpush.bf16.msra.mxu0 %v1595
        %1655 = vmatpush.bf16.msra.mxu0 %v1594
        %1656 = vmatpush.bf16.msra.mxu0 %v1593
        %1657 = vmatpush.bf16.msra.mxu0 %v1592
        %1658 = vmatpush.bf16.msra.mxu0 %v1591
        %1659 = vmatpush.bf16.msra.mxu0 %v1590
        %1660 = vmatpush.bf16.msra.mxu0 %v1589
        %1661 = vmatmul.bf16.gmra.mxu0 %v1392
        %v1662 = vpop.f32.mrf.mxu0
        %v1663 = vadd.f32 0.0, %v1662
        %v1664 = vpop.f32.mrf.mxu0
        %v1665 = vadd.f32 0.0, %v1664
        %1666 = vdwg.mxu0
        %1667 = vmatpush.bf16.msra.mxu0 %v1604
        %1668 = vmatpush.bf16.msra.mxu0 %v1603
        %1669 = vmatpush.bf16.msra.mxu0 %v1602
        %1670 = vmatpush.bf16.msra.mxu0 %v1601
        %1671 = vmatpush.bf16.msra.mxu0 %v1600
        %1672 = vmatpush.bf16.msra.mxu0 %v1599
        %1673 = vmatpush.bf16.msra.mxu0 %v1598
        %1674 = vmatpush.bf16.msra.mxu0 %v1597
        %1675 = vmatmul.bf16.gmra.mxu0 %v1393
        %v1676 = vpop.f32.mrf.mxu0
        %v1677 = vadd.f32 %v1663, %v1676
        %v1678 = vpop.f32.mrf.mxu0
        %v1679 = vadd.f32 %v1665, %v1678
        %1680 = vdwg.mxu0
        %1681 = vmatpush.bf16.msra.mxu0 %v1612
        %1682 = vmatpush.bf16.msra.mxu0 %v1611
        %1683 = vmatpush.bf16.msra.mxu0 %v1610
        %1684 = vmatpush.bf16.msra.mxu0 %v1609
        %1685 = vmatpush.bf16.msra.mxu0 %v1608
        %1686 = vmatpush.bf16.msra.mxu0 %v1607
        %1687 = vmatpush.bf16.msra.mxu0 %v1606
        %1688 = vmatpush.bf16.msra.mxu0 %v1605
        %1689 = vmatmul.bf16.gmra.mxu0 %v1394
        %v1690 = vpop.f32.mrf.mxu0
        %v1691 = vadd.f32 %v1677, %v1690
        %v1692 = vpop.f32.mrf.mxu0
        %v1693 = vadd.f32 %v1679, %v1692
        %1694 = vdwg.mxu0
        %1695 = vmatpush.bf16.msra.mxu0 %v1620
        %1696 = vmatpush.bf16.msra.mxu0 %v1619
        %1697 = vmatpush.bf16.msra.mxu0 %v1618
        %1698 = vmatpush.bf16.msra.mxu0 %v1617
        %1699 = vmatpush.bf16.msra.mxu0 %v1616
        %1700 = vmatpush.bf16.msra.mxu0 %v1615
        %1701 = vmatpush.bf16.msra.mxu0 %v1614
        %1702 = vmatpush.bf16.msra.mxu0 %v1613
        %1703 = vmatmul.bf16.gmra.mxu0 %v1395
        %v1704 = vpop.f32.mrf.mxu0
        %v1705 = vadd.f32 %v1691, %v1704
        %v1706 = vpop.f32.mrf.mxu0
        %v1707 = vadd.f32 %v1693, %v1706
        %1708 = vdwg.mxu0
        %v1773 = vunpack.c.l.b16 %v1199
        %v1774 = vunpack.c.l.b16 %v1200
        %v1775 = vunpack.c.l.b16 %v1201
        %v1776 = vunpack.c.l.b16 %v1202
        %v1777 = vunpack.c.l.b16 %v1203
        %v1778 = vunpack.c.l.b16 %v1204
        %v1779 = vunpack.c.l.b16 %v1205
        %v1780 = vunpack.c.l.b16 %v1206
        %v1781 = vunpack.c.l.b16 %v1207
        %v1782 = vunpack.c.l.b16 %v1208
        %v1783 = vunpack.c.l.b16 %v1209
        %v1784 = vunpack.c.l.b16 %v1210
        %v1785 = vunpack.c.l.b16 %v1211
        %v1786 = vunpack.c.l.b16 %v1212
        %v1787 = vunpack.c.l.b16 %v1213
        %v1788 = vunpack.c.l.b16 %v1214
        %v1789 = vunpack.c.l.b16 %v1215
        %v1790 = vunpack.c.l.b16 %v1216
        %v1791 = vunpack.c.l.b16 %v1217
        %v1792 = vunpack.c.l.b16 %v1218
        %v1793 = vunpack.c.l.b16 %v1219
        %v1794 = vunpack.c.l.b16 %v1220
        %v1795 = vunpack.c.l.b16 %v1221
        %v1796 = vunpack.c.l.b16 %v1222
        %v1797 = vunpack.c.l.b16 %v1223
        %v1798 = vunpack.c.l.b16 %v1224
        %v1799 = vunpack.c.l.b16 %v1225
        %v1800 = vunpack.c.l.b16 %v1226
        %v1801 = vunpack.c.l.b16 %v1227
        %v1802 = vunpack.c.l.b16 %v1228
        %v1803 = vunpack.c.l.b16 %v1229
        %v1804 = vunpack.c.l.b16 %v1230
        %v1805 = vunpack.c.l.b16 %v1231
        %v1806 = vunpack.c.l.b16 %v1232
        %v1807 = vunpack.c.l.b16 %v1233
        %v1808 = vunpack.c.l.b16 %v1234
        %v1809 = vunpack.c.l.b16 %v1235
        %v1810 = vunpack.c.l.b16 %v1236
        %v1811 = vunpack.c.l.b16 %v1237
        %v1812 = vunpack.c.l.b16 %v1238
        %v1813 = vunpack.c.l.b16 %v1239
        %v1814 = vunpack.c.l.b16 %v1240
        %v1815 = vunpack.c.l.b16 %v1241
        %v1816 = vunpack.c.l.b16 %v1242
        %v1817 = vunpack.c.l.b16 %v1243
        %v1818 = vunpack.c.l.b16 %v1244
        %v1819 = vunpack.c.l.b16 %v1245
        %v1820 = vunpack.c.l.b16 %v1246
        %v1821 = vunpack.c.l.b16 %v1247
        %v1822 = vunpack.c.l.b16 %v1248
        %v1823 = vunpack.c.l.b16 %v1249
        %v1824 = vunpack.c.l.b16 %v1250
        %v1825 = vunpack.c.l.b16 %v1251
        %v1826 = vunpack.c.l.b16 %v1252
        %v1827 = vunpack.c.l.b16 %v1253
        %v1828 = vunpack.c.l.b16 %v1254
        %v1829 = vunpack.c.l.b16 %v1255
        %v1830 = vunpack.c.l.b16 %v1256
        %v1831 = vunpack.c.l.b16 %v1257
        %v1832 = vunpack.c.l.b16 %v1258
        %v1833 = vunpack.c.l.b16 %v1259
        %v1834 = vunpack.c.l.b16 %v1260
        %v1835 = vunpack.c.l.b16 %v1261
        %v1836 = vunpack.c.l.b16 %v1262
        %v1837 = vpack.c.b16 %v1774, %v1773
        %v1838 = vpack.c.b16 %v1776, %v1775
        %v1839 = vpack.c.b16 %v1778, %v1777
        %v1840 = vpack.c.b16 %v1780, %v1779
        %v1841 = vpack.c.b16 %v1782, %v1781
        %v1842 = vpack.c.b16 %v1784, %v1783
        %v1843 = vpack.c.b16 %v1786, %v1785
        %v1844 = vpack.c.b16 %v1788, %v1787
        %v1845 = vpack.c.b16 %v1790, %v1789
        %v1846 = vpack.c.b16 %v1792, %v1791
        %v1847 = vpack.c.b16 %v1794, %v1793
        %v1848 = vpack.c.b16 %v1796, %v1795
        %v1849 = vpack.c.b16 %v1798, %v1797
        %v1850 = vpack.c.b16 %v1800, %v1799
        %v1851 = vpack.c.b16 %v1802, %v1801
        %v1852 = vpack.c.b16 %v1804, %v1803
        %v1853 = vpack.c.b16 %v1806, %v1805
        %v1854 = vpack.c.b16 %v1808, %v1807
        %v1855 = vpack.c.b16 %v1810, %v1809
        %v1856 = vpack.c.b16 %v1812, %v1811
        %v1857 = vpack.c.b16 %v1814, %v1813
        %v1858 = vpack.c.b16 %v1816, %v1815
        %v1859 = vpack.c.b16 %v1818, %v1817
        %v1860 = vpack.c.b16 %v1820, %v1819
        %v1861 = vpack.c.b16 %v1822, %v1821
        %v1862 = vpack.c.b16 %v1824, %v1823
        %v1863 = vpack.c.b16 %v1826, %v1825
        %v1864 = vpack.c.b16 %v1828, %v1827
        %v1865 = vpack.c.b16 %v1830, %v1829
        %v1866 = vpack.c.b16 %v1832, %v1831
        %v1867 = vpack.c.b16 %v1834, %v1833
        %v1868 = vpack.c.b16 %v1836, %v1835
        %1901 = vmatpush.bf16.msra.mxu0 %v1844
        %1902 = vmatpush.bf16.msra.mxu0 %v1843
        %1903 = vmatpush.bf16.msra.mxu0 %v1842
        %1904 = vmatpush.bf16.msra.mxu0 %v1841
        %1905 = vmatpush.bf16.msra.mxu0 %v1840
        %1906 = vmatpush.bf16.msra.mxu0 %v1839
        %1907 = vmatpush.bf16.msra.mxu0 %v1838
        %1908 = vmatpush.bf16.msra.mxu0 %v1837
        %1909 = vmatmul.bf16.gmra.mxu0 %v1195
        %v1910 = vpop.f32.mrf.mxu0
        %v1911 = vadd.f32 %v1705, %v1910
        %v1912 = vpop.f32.mrf.mxu0
        %v1913 = vadd.f32 %v1707, %v1912
        %1914 = vdwg.mxu0
        %1915 = vmatpush.bf16.msra.mxu0 %v1852
        %1916 = vmatpush.bf16.msra.mxu0 %v1851
        %1917 = vmatpush.bf16.msra.mxu0 %v1850
        %1918 = vmatpush.bf16.msra.mxu0 %v1849
        %1919 = vmatpush.bf16.msra.mxu0 %v1848
        %1920 = vmatpush.bf16.msra.mxu0 %v1847
        %1921 = vmatpush.bf16.msra.mxu0 %v1846
        %1922 = vmatpush.bf16.msra.mxu0 %v1845
        %1923 = vmatmul.bf16.gmra.mxu0 %v1196
        %v1924 = vpop.f32.mrf.mxu0
        %v1925 = vadd.f32 %v1911, %v1924
        %v1926 = vpop.f32.mrf.mxu0
        %v1927 = vadd.f32 %v1913, %v1926
        %1928 = vdwg.mxu0
        %1929 = vmatpush.bf16.msra.mxu0 %v1860
        %1930 = vmatpush.bf16.msra.mxu0 %v1859
        %1931 = vmatpush.bf16.msra.mxu0 %v1858
        %1932 = vmatpush.bf16.msra.mxu0 %v1857
        %1933 = vmatpush.bf16.msra.mxu0 %v1856
        %1934 = vmatpush.bf16.msra.mxu0 %v1855
        %1935 = vmatpush.bf16.msra.mxu0 %v1854
        %1936 = vmatpush.bf16.msra.mxu0 %v1853
        %1937 = vmatmul.bf16.gmra.mxu0 %v1197
        %v1938 = vpop.f32.mrf.mxu0
        %v1939 = vadd.f32 %v1925, %v1938
        %v1940 = vpop.f32.mrf.mxu0
        %v1941 = vadd.f32 %v1927, %v1940
        %1942 = vdwg.mxu0
        %1943 = vmatpush.bf16.msra.mxu0 %v1868
        %1944 = vmatpush.bf16.msra.mxu0 %v1867
        %1945 = vmatpush.bf16.msra.mxu0 %v1866
        %1946 = vmatpush.bf16.msra.mxu0 %v1865
        %1947 = vmatpush.bf16.msra.mxu0 %v1864
        %1948 = vmatpush.bf16.msra.mxu0 %v1863
        %1949 = vmatpush.bf16.msra.mxu0 %v1862
        %1950 = vmatpush.bf16.msra.mxu0 %v1861
        %1951 = vmatmul.bf16.gmra.mxu0 %v1198
        %v1952 = vpop.f32.mrf.mxu0
        %v1953 = vadd.f32 %v1939, %v1952
        %v1954 = vpop.f32.mrf.mxu0
        %v1955 = vadd.f32 %v1941, %v1954
        %1956 = vdwg.mxu0
        %s1957 = scalar_lea.vmem %s383, 128
        %v1958 = vld [vmem:[%s1957] sm:$0xff]
        %v1959 = vld [vmem:[%s1957 + $0x8] sm:$0xff]
        %v1960 = vld [vmem:[%s1957 + $0x10] sm:$0xff]
        %v1961 = vld [vmem:[%s1957 + $0x18] sm:$0xff]
        %v1962 = vld [vmem:[%s1957 + $0x20] sm:$0xff]
        %v1963 = vld [vmem:[%s1957 + $0x28] sm:$0xff]
        %v1964 = vld [vmem:[%s1957 + $0x30] sm:$0xff]
        %v1965 = vld [vmem:[%s1957 + $0x38] sm:$0xff]
        %s1966 = scalar_lea.vmem %s387, 8
        %v1967 = vld [vmem:[%s1966] sm:$0xf]
        %v1968 = vunpack.c.l.bf16 %v1967
        %v1970 = vperm.slane %v1968, 0
        %v1971 = vperm.slane %v1968, 2
        %v1972 = vperm.slane %v1968, 4
        %v1973 = vperm.slane %v1968, 6
        %v1978 = vperm.slane %v1970, 0
        %v1979 = vperm.slane %v1971, 0
        %v1980 = vperm.slane %v1972, 0
        %v1981 = vperm.slane %v1973, 0
        %v1990 = vunpack.c.l.b16 %v1958
        %v1991 = vunpack.c.h.b16 %v1958
        %v1992 = vunpack.c.l.b16 %v1959
        %v1993 = vunpack.c.h.b16 %v1959
        %v1994 = vunpack.c.l.b16 %v1960
        %v1995 = vunpack.c.h.b16 %v1960
        %v1996 = vunpack.c.l.b16 %v1961
        %v1997 = vunpack.c.h.b16 %v1961
        %v1998 = vunpack.c.l.b16 %v1962
        %v1999 = vunpack.c.h.b16 %v1962
        %v2000 = vunpack.c.l.b16 %v1963
        %v2001 = vunpack.c.h.b16 %v1963
        %v2002 = vunpack.c.l.b16 %v1964
        %v2003 = vunpack.c.h.b16 %v1964
        %v2004 = vunpack.c.l.b16 %v1965
        %v2005 = vunpack.c.h.b16 %v1965
        %v2006 = vpack.c.b16 %v1994, %v1990
        %v2007 = vpack.c.b16 %v1995, %v1991
        %v2008 = vpack.c.b16 %v1996, %v1992
        %v2009 = vpack.c.b16 %v1997, %v1993
        %v2010 = vpack.c.b16 %v2002, %v1998
        %v2011 = vpack.c.b16 %v2003, %v1999
        %v2012 = vpack.c.b16 %v2004, %v2000
        %v2013 = vpack.c.b16 %v2005, %v2001
        %2022 = vmatpush.bf16.msra.mxu0 0
        %2023 = vmatpush.bf16.msra.mxu0 0
        %2024 = vmatpush.bf16.msra.mxu0 0
        %2025 = vmatpush.bf16.msra.mxu0 0
        %2026 = vmatpush.bf16.msra.mxu0 0
        %2027 = vmatpush.bf16.msra.mxu0 0
        %2028 = vmatpush.bf16.msra.mxu0 %v2010
        %2029 = vmatpush.bf16.msra.mxu0 %v2006
        %2030 = vmatmul.bf16.gmra.mxu0 %v1129
        %v2031 = vpop.f32.mrf.mxu0
        %v2032 = vadd.f32 %v1978, %v2031
        %v2033 = vpop.f32.mrf.mxu0
        %v2034 = vadd.f32 %v1978, %v2033
        %2035 = vdwg.mxu0
        %2036 = vmatpush.bf16.msra.mxu0 0
        %2037 = vmatpush.bf16.msra.mxu0 0
        %2038 = vmatpush.bf16.msra.mxu0 0
        %2039 = vmatpush.bf16.msra.mxu0 0
        %2040 = vmatpush.bf16.msra.mxu0 0
        %2041 = vmatpush.bf16.msra.mxu0 0
        %2042 = vmatpush.bf16.msra.mxu0 %v2011
        %2043 = vmatpush.bf16.msra.mxu0 %v2007
        %2044 = vmatmul.bf16.gmra.mxu0 %v1129
        %v2045 = vpop.f32.mrf.mxu0
        %v2046 = vadd.f32 %v1979, %v2045
        %v2047 = vpop.f32.mrf.mxu0
        %v2048 = vadd.f32 %v1979, %v2047
        %2049 = vdwg.mxu0
        %2050 = vmatpush.bf16.msra.mxu0 0
        %2051 = vmatpush.bf16.msra.mxu0 0
        %2052 = vmatpush.bf16.msra.mxu0 0
        %2053 = vmatpush.bf16.msra.mxu0 0
        %2054 = vmatpush.bf16.msra.mxu0 0
        %2055 = vmatpush.bf16.msra.mxu0 0
        %2056 = vmatpush.bf16.msra.mxu0 %v2012
        %2057 = vmatpush.bf16.msra.mxu0 %v2008
        %2058 = vmatmul.bf16.gmra.mxu0 %v1129
        %v2059 = vpop.f32.mrf.mxu0
        %v2060 = vadd.f32 %v1980, %v2059
        %v2061 = vpop.f32.mrf.mxu0
        %v2062 = vadd.f32 %v1980, %v2061
        %2063 = vdwg.mxu0
        %2064 = vmatpush.bf16.msra.mxu0 0
        %2065 = vmatpush.bf16.msra.mxu0 0
        %2066 = vmatpush.bf16.msra.mxu0 0
        %2067 = vmatpush.bf16.msra.mxu0 0
        %2068 = vmatpush.bf16.msra.mxu0 0
        %2069 = vmatpush.bf16.msra.mxu0 0
        %2070 = vmatpush.bf16.msra.mxu0 %v2013
        %2071 = vmatpush.bf16.msra.mxu0 %v2009
        %2072 = vmatmul.bf16.gmra.mxu0 %v1129
        %v2073 = vpop.f32.mrf.mxu0
        %v2074 = vadd.f32 %v1981, %v2073
        %v2075 = vpop.f32.mrf.mxu0
        %v2076 = vadd.f32 %v1981, %v2075
        %2077 = vdwg.mxu0
        %v2078 = vmax.f32 %v2032, 0.0
        %v2079 = vmax.f32 %v2046, 0.0
        %v2080 = vmax.f32 %v2060, 0.0
        %v2081 = vmax.f32 %v2074, 0.0
        %v2082 = vmax.f32 %v2034, 0.0
        %v2083 = vmax.f32 %v2048, 0.0
        %v2084 = vmax.f32 %v2062, 0.0
        %v2085 = vmax.f32 %v2076, 0.0
        %v2086 = vpack.c.bf16 %v2082, %v2078
        %v2087 = vpack.c.bf16 %v2083, %v2079
        %v2088 = vpack.c.bf16 %v2084, %v2080
        %v2089 = vpack.c.bf16 %v2085, %v2081
        %s2090 = scalar_lea.vmem %s392, 512
        %v2091 = vld [vmem:[%s2090] sm:$0xf]
        %v2092 = vld [vmem:[%s2090 + $0x4] sm:$0xf]
        %v2093 = vld [vmem:[%s2090 + $0x8] sm:$0xf]
        %v2094 = vld [vmem:[%s2090 + $0xc] sm:$0xf]
        %v2095 = vld [vmem:[%s2090 + $0x10] sm:$0xf]
        %v2096 = vld [vmem:[%s2090 + $0x14] sm:$0xf]
        %v2097 = vld [vmem:[%s2090 + $0x18] sm:$0xf]
        %v2098 = vld [vmem:[%s2090 + $0x1c] sm:$0xf]
        %v2099 = vld [vmem:[%s2090 + $0x20] sm:$0xf]
        %v2100 = vld [vmem:[%s2090 + $0x24] sm:$0xf]
        %v2101 = vld [vmem:[%s2090 + $0x28] sm:$0xf]
        %v2102 = vld [vmem:[%s2090 + $0x2c] sm:$0xf]
        %v2103 = vld [vmem:[%s2090 + $0x30] sm:$0xf]
        %v2104 = vld [vmem:[%s2090 + $0x34] sm:$0xf]
        %v2105 = vld [vmem:[%s2090 + $0x38] sm:$0xf]
        %v2106 = vld [vmem:[%s2090 + $0x3c] sm:$0xf]
        %v2107 = vld [vmem:[%s2090 + $0x40] sm:$0xf]
        %v2108 = vld [vmem:[%s2090 + $0x44] sm:$0xf]
        %v2109 = vld [vmem:[%s2090 + $0x48] sm:$0xf]
        %v2110 = vld [vmem:[%s2090 + $0x4c] sm:$0xf]
        %v2111 = vld [vmem:[%s2090 + $0x50] sm:$0xf]
        %v2112 = vld [vmem:[%s2090 + $0x54] sm:$0xf]
        %v2113 = vld [vmem:[%s2090 + $0x58] sm:$0xf]
        %v2114 = vld [vmem:[%s2090 + $0x5c] sm:$0xf]
        %v2115 = vld [vmem:[%s2090 + $0x60] sm:$0xf]
        %v2116 = vld [vmem:[%s2090 + $0x64] sm:$0xf]
        %v2117 = vld [vmem:[%s2090 + $0x68] sm:$0xf]
        %v2118 = vld [vmem:[%s2090 + $0x6c] sm:$0xf]
        %v2119 = vld [vmem:[%s2090 + $0x70] sm:$0xf]
        %v2120 = vld [vmem:[%s2090 + $0x74] sm:$0xf]
        %v2121 = vld [vmem:[%s2090 + $0x78] sm:$0xf]
        %v2122 = vld [vmem:[%s2090 + $0x7c] sm:$0xf]
        %v2123 = vld [vmem:[%s2090 + $0x80] sm:$0xf]
        %v2124 = vld [vmem:[%s2090 + $0x84] sm:$0xf]
        %v2125 = vld [vmem:[%s2090 + $0x88] sm:$0xf]
        %v2126 = vld [vmem:[%s2090 + $0x8c] sm:$0xf]
        %v2127 = vld [vmem:[%s2090 + $0x90] sm:$0xf]
        %v2128 = vld [vmem:[%s2090 + $0x94] sm:$0xf]
        %v2129 = vld [vmem:[%s2090 + $0x98] sm:$0xf]
        %v2130 = vld [vmem:[%s2090 + $0x9c] sm:$0xf]
        %v2131 = vld [vmem:[%s2090 + $0xa0] sm:$0xf]
        %v2132 = vld [vmem:[%s2090 + $0xa4] sm:$0xf]
        %v2133 = vld [vmem:[%s2090 + $0xa8] sm:$0xf]
        %v2134 = vld [vmem:[%s2090 + $0xac] sm:$0xf]
        %v2135 = vld [vmem:[%s2090 + $0xb0] sm:$0xf]
        %v2136 = vld [vmem:[%s2090 + $0xb4] sm:$0xf]
        %v2137 = vld [vmem:[%s2090 + $0xb8] sm:$0xf]
        %v2138 = vld [vmem:[%s2090 + $0xbc] sm:$0xf]
        %v2139 = vld [vmem:[%s2090 + $0xc0] sm:$0xf]
        %v2140 = vld [vmem:[%s2090 + $0xc4] sm:$0xf]
        %v2141 = vld [vmem:[%s2090 + $0xc8] sm:$0xf]
        %v2142 = vld [vmem:[%s2090 + $0xcc] sm:$0xf]
        %v2143 = vld [vmem:[%s2090 + $0xd0] sm:$0xf]
        %v2144 = vld [vmem:[%s2090 + $0xd4] sm:$0xf]
        %v2145 = vld [vmem:[%s2090 + $0xd8] sm:$0xf]
        %v2146 = vld [vmem:[%s2090 + $0xdc] sm:$0xf]
        %v2147 = vld [vmem:[%s2090 + $0xe0] sm:$0xf]
        %v2148 = vld [vmem:[%s2090 + $0xe4] sm:$0xf]
        %v2149 = vld [vmem:[%s2090 + $0xe8] sm:$0xf]
        %v2150 = vld [vmem:[%s2090 + $0xec] sm:$0xf]
        %v2151 = vld [vmem:[%s2090 + $0xf0] sm:$0xf]
        %v2152 = vld [vmem:[%s2090 + $0xf4] sm:$0xf]
        %v2153 = vld [vmem:[%s2090 + $0xf8] sm:$0xf]
        %v2154 = vld [vmem:[%s2090 + $0xfc] sm:$0xf]
        %v2219 = vunpack.c.l.b16 %v2091
        %v2220 = vunpack.c.l.b16 %v2092
        %v2221 = vunpack.c.l.b16 %v2093
        %v2222 = vunpack.c.l.b16 %v2094
        %v2223 = vunpack.c.l.b16 %v2095
        %v2224 = vunpack.c.l.b16 %v2096
        %v2225 = vunpack.c.l.b16 %v2097
        %v2226 = vunpack.c.l.b16 %v2098
        %v2227 = vunpack.c.l.b16 %v2099
        %v2228 = vunpack.c.l.b16 %v2100
        %v2229 = vunpack.c.l.b16 %v2101
        %v2230 = vunpack.c.l.b16 %v2102
        %v2231 = vunpack.c.l.b16 %v2103
        %v2232 = vunpack.c.l.b16 %v2104
        %v2233 = vunpack.c.l.b16 %v2105
        %v2234 = vunpack.c.l.b16 %v2106
        %v2235 = vunpack.c.l.b16 %v2107
        %v2236 = vunpack.c.l.b16 %v2108
        %v2237 = vunpack.c.l.b16 %v2109
        %v2238 = vunpack.c.l.b16 %v2110
        %v2239 = vunpack.c.l.b16 %v2111
        %v2240 = vunpack.c.l.b16 %v2112
        %v2241 = vunpack.c.l.b16 %v2113
        %v2242 = vunpack.c.l.b16 %v2114
        %v2243 = vunpack.c.l.b16 %v2115
        %v2244 = vunpack.c.l.b16 %v2116
        %v2245 = vunpack.c.l.b16 %v2117
        %v2246 = vunpack.c.l.b16 %v2118
        %v2247 = vunpack.c.l.b16 %v2119
        %v2248 = vunpack.c.l.b16 %v2120
        %v2249 = vunpack.c.l.b16 %v2121
        %v2250 = vunpack.c.l.b16 %v2122
        %v2251 = vunpack.c.l.b16 %v2123
        %v2252 = vunpack.c.l.b16 %v2124
        %v2253 = vunpack.c.l.b16 %v2125
        %v2254 = vunpack.c.l.b16 %v2126
        %v2255 = vunpack.c.l.b16 %v2127
        %v2256 = vunpack.c.l.b16 %v2128
        %v2257 = vunpack.c.l.b16 %v2129
        %v2258 = vunpack.c.l.b16 %v2130
        %v2259 = vunpack.c.l.b16 %v2131
        %v2260 = vunpack.c.l.b16 %v2132
        %v2261 = vunpack.c.l.b16 %v2133
        %v2262 = vunpack.c.l.b16 %v2134
        %v2263 = vunpack.c.l.b16 %v2135
        %v2264 = vunpack.c.l.b16 %v2136
        %v2265 = vunpack.c.l.b16 %v2137
        %v2266 = vunpack.c.l.b16 %v2138
        %v2267 = vunpack.c.l.b16 %v2139
        %v2268 = vunpack.c.l.b16 %v2140
        %v2269 = vunpack.c.l.b16 %v2141
        %v2270 = vunpack.c.l.b16 %v2142
        %v2271 = vunpack.c.l.b16 %v2143
        %v2272 = vunpack.c.l.b16 %v2144
        %v2273 = vunpack.c.l.b16 %v2145
        %v2274 = vunpack.c.l.b16 %v2146
        %v2275 = vunpack.c.l.b16 %v2147
        %v2276 = vunpack.c.l.b16 %v2148
        %v2277 = vunpack.c.l.b16 %v2149
        %v2278 = vunpack.c.l.b16 %v2150
        %v2279 = vunpack.c.l.b16 %v2151
        %v2280 = vunpack.c.l.b16 %v2152
        %v2281 = vunpack.c.l.b16 %v2153
        %v2282 = vunpack.c.l.b16 %v2154
        %v2283 = vpack.c.b16 %v2220, %v2219
        %v2284 = vpack.c.b16 %v2222, %v2221
        %v2285 = vpack.c.b16 %v2224, %v2223
        %v2286 = vpack.c.b16 %v2226, %v2225
        %v2287 = vpack.c.b16 %v2228, %v2227
        %v2288 = vpack.c.b16 %v2230, %v2229
        %v2289 = vpack.c.b16 %v2232, %v2231
        %v2290 = vpack.c.b16 %v2234, %v2233
        %v2291 = vpack.c.b16 %v2236, %v2235
        %v2292 = vpack.c.b16 %v2238, %v2237
        %v2293 = vpack.c.b16 %v2240, %v2239
        %v2294 = vpack.c.b16 %v2242, %v2241
        %v2295 = vpack.c.b16 %v2244, %v2243
        %v2296 = vpack.c.b16 %v2246, %v2245
        %v2297 = vpack.c.b16 %v2248, %v2247
        %v2298 = vpack.c.b16 %v2250, %v2249
        %v2299 = vpack.c.b16 %v2252, %v2251
        %v2300 = vpack.c.b16 %v2254, %v2253
        %v2301 = vpack.c.b16 %v2256, %v2255
        %v2302 = vpack.c.b16 %v2258, %v2257
        %v2303 = vpack.c.b16 %v2260, %v2259
        %v2304 = vpack.c.b16 %v2262, %v2261
        %v2305 = vpack.c.b16 %v2264, %v2263
        %v2306 = vpack.c.b16 %v2266, %v2265
        %v2307 = vpack.c.b16 %v2268, %v2267
        %v2308 = vpack.c.b16 %v2270, %v2269
        %v2309 = vpack.c.b16 %v2272, %v2271
        %v2310 = vpack.c.b16 %v2274, %v2273
        %v2311 = vpack.c.b16 %v2276, %v2275
        %v2312 = vpack.c.b16 %v2278, %v2277
        %v2313 = vpack.c.b16 %v2280, %v2279
        %v2314 = vpack.c.b16 %v2282, %v2281
        %2347 = vmatpush.bf16.msra.mxu0 %v2290
        %2348 = vmatpush.bf16.msra.mxu0 %v2289
        %2349 = vmatpush.bf16.msra.mxu0 %v2288
        %2350 = vmatpush.bf16.msra.mxu0 %v2287
        %2351 = vmatpush.bf16.msra.mxu0 %v2286
        %2352 = vmatpush.bf16.msra.mxu0 %v2285
        %2353 = vmatpush.bf16.msra.mxu0 %v2284
        %2354 = vmatpush.bf16.msra.mxu0 %v2283
        %2355 = vmatmul.bf16.gmra.mxu0 %v2086
        %v2356 = vpop.f32.mrf.mxu0
        %v2357 = vadd.f32 0.0, %v2356
        %v2358 = vpop.f32.mrf.mxu0
        %v2359 = vadd.f32 0.0, %v2358
        %2360 = vdwg.mxu0
        %2361 = vmatpush.bf16.msra.mxu0 %v2298
        %2362 = vmatpush.bf16.msra.mxu0 %v2297
        %2363 = vmatpush.bf16.msra.mxu0 %v2296
        %2364 = vmatpush.bf16.msra.mxu0 %v2295
        %2365 = vmatpush.bf16.msra.mxu0 %v2294
        %2366 = vmatpush.bf16.msra.mxu0 %v2293
        %2367 = vmatpush.bf16.msra.mxu0 %v2292
        %2368 = vmatpush.bf16.msra.mxu0 %v2291
        %2369 = vmatmul.bf16.gmra.mxu0 %v2087
        %v2370 = vpop.f32.mrf.mxu0
        %v2371 = vadd.f32 %v2357, %v2370
        %v2372 = vpop.f32.mrf.mxu0
        %v2373 = vadd.f32 %v2359, %v2372
        %2374 = vdwg.mxu0
        %2375 = vmatpush.bf16.msra.mxu0 %v2306
        %2376 = vmatpush.bf16.msra.mxu0 %v2305
        %2377 = vmatpush.bf16.msra.mxu0 %v2304
        %2378 = vmatpush.bf16.msra.mxu0 %v2303
        %2379 = vmatpush.bf16.msra.mxu0 %v2302
        %2380 = vmatpush.bf16.msra.mxu0 %v2301
        %2381 = vmatpush.bf16.msra.mxu0 %v2300
        %2382 = vmatpush.bf16.msra.mxu0 %v2299
        %2383 = vmatmul.bf16.gmra.mxu0 %v2088
        %v2384 = vpop.f32.mrf.mxu0
        %v2385 = vadd.f32 %v2371, %v2384
        %v2386 = vpop.f32.mrf.mxu0
        %v2387 = vadd.f32 %v2373, %v2386
        %2388 = vdwg.mxu0
        %2389 = vmatpush.bf16.msra.mxu0 %v2314
        %2390 = vmatpush.bf16.msra.mxu0 %v2313
        %2391 = vmatpush.bf16.msra.mxu0 %v2312
        %2392 = vmatpush.bf16.msra.mxu0 %v2311
        %2393 = vmatpush.bf16.msra.mxu0 %v2310
        %2394 = vmatpush.bf16.msra.mxu0 %v2309
        %2395 = vmatpush.bf16.msra.mxu0 %v2308
        %2396 = vmatpush.bf16.msra.mxu0 %v2307
        %2397 = vmatmul.bf16.gmra.mxu0 %v2089
        %v2398 = vpop.f32.mrf.mxu0
        %v2399 = vadd.f32 %v2385, %v2398
        %v2400 = vpop.f32.mrf.mxu0
        %v2401 = vadd.f32 %v2387, %v2400
        %2402 = vdwg.mxu0
        %v2403 = vadd.f32 %v1953, %v2399
        %v2404 = vadd.f32 %v1955, %v2401
        %s2405 = scalar_lea.vmem %s383, 192
        %v2406 = vld [vmem:[%s2405] sm:$0xff]
        %v2407 = vld [vmem:[%s2405 + $0x8] sm:$0xff]
        %v2408 = vld [vmem:[%s2405 + $0x10] sm:$0xff]
        %v2409 = vld [vmem:[%s2405 + $0x18] sm:$0xff]
        %v2410 = vld [vmem:[%s2405 + $0x20] sm:$0xff]
        %v2411 = vld [vmem:[%s2405 + $0x28] sm:$0xff]
        %v2412 = vld [vmem:[%s2405 + $0x30] sm:$0xff]
        %v2413 = vld [vmem:[%s2405 + $0x38] sm:$0xff]
        %s2414 = scalar_lea.vmem %s387, 12
        %v2415 = vld [vmem:[%s2414] sm:$0xf]
        %v2416 = vunpack.c.l.bf16 %v2415
        %v2418 = vperm.slane %v2416, 0
        %v2419 = vperm.slane %v2416, 2
        %v2420 = vperm.slane %v2416, 4
        %v2421 = vperm.slane %v2416, 6
        %v2426 = vperm.slane %v2418, 0
        %v2427 = vperm.slane %v2419, 0
        %v2428 = vperm.slane %v2420, 0
        %v2429 = vperm.slane %v2421, 0
        %v2438 = vunpack.c.l.b16 %v2406
        %v2439 = vunpack.c.h.b16 %v2406
        %v2440 = vunpack.c.l.b16 %v2407
        %v2441 = vunpack.c.h.b16 %v2407
        %v2442 = vunpack.c.l.b16 %v2408
        %v2443 = vunpack.c.h.b16 %v2408
        %v2444 = vunpack.c.l.b16 %v2409
        %v2445 = vunpack.c.h.b16 %v2409
        %v2446 = vunpack.c.l.b16 %v2410
        %v2447 = vunpack.c.h.b16 %v2410
        %v2448 = vunpack.c.l.b16 %v2411
        %v2449 = vunpack.c.h.b16 %v2411
        %v2450 = vunpack.c.l.b16 %v2412
        %v2451 = vunpack.c.h.b16 %v2412
        %v2452 = vunpack.c.l.b16 %v2413
        %v2453 = vunpack.c.h.b16 %v2413
        %v2454 = vpack.c.b16 %v2442, %v2438
        %v2455 = vpack.c.b16 %v2443, %v2439
        %v2456 = vpack.c.b16 %v2444, %v2440
        %v2457 = vpack.c.b16 %v2445, %v2441
        %v2458 = vpack.c.b16 %v2450, %v2446
        %v2459 = vpack.c.b16 %v2451, %v2447
        %v2460 = vpack.c.b16 %v2452, %v2448
        %v2461 = vpack.c.b16 %v2453, %v2449
        %2470 = vmatpush.bf16.msra.mxu0 0
        %2471 = vmatpush.bf16.msra.mxu0 0
        %2472 = vmatpush.bf16.msra.mxu0 0
        %2473 = vmatpush.bf16.msra.mxu0 0
        %2474 = vmatpush.bf16.msra.mxu0 0
        %2475 = vmatpush.bf16.msra.mxu0 0
        %2476 = vmatpush.bf16.msra.mxu0 %v2458
        %2477 = vmatpush.bf16.msra.mxu0 %v2454
        %2478 = vmatmul.bf16.gmra.mxu0 %v1129
        %v2479 = vpop.f32.mrf.mxu0
        %v2480 = vadd.f32 %v2426, %v2479
        %v2481 = vpop.f32.mrf.mxu0
        %v2482 = vadd.f32 %v2426, %v2481
        %2483 = vdwg.mxu0
        %2484 = vmatpush.bf16.msra.mxu0 0
        %2485 = vmatpush.bf16.msra.mxu0 0
        %2486 = vmatpush.bf16.msra.mxu0 0
        %2487 = vmatpush.bf16.msra.mxu0 0
        %2488 = vmatpush.bf16.msra.mxu0 0
        %2489 = vmatpush.bf16.msra.mxu0 0
        %2490 = vmatpush.bf16.msra.mxu0 %v2459
        %2491 = vmatpush.bf16.msra.mxu0 %v2455
        %2492 = vmatmul.bf16.gmra.mxu0 %v1129
        %v2493 = vpop.f32.mrf.mxu0
        %v2494 = vadd.f32 %v2427, %v2493
        %v2495 = vpop.f32.mrf.mxu0
        %v2496 = vadd.f32 %v2427, %v2495
        %2497 = vdwg.mxu0
        %2498 = vmatpush.bf16.msra.mxu0 0
        %2499 = vmatpush.bf16.msra.mxu0 0
        %2500 = vmatpush.bf16.msra.mxu0 0
        %2501 = vmatpush.bf16.msra.mxu0 0
        %2502 = vmatpush.bf16.msra.mxu0 0
        %2503 = vmatpush.bf16.msra.mxu0 0
        %2504 = vmatpush.bf16.msra.mxu0 %v2460
        %2505 = vmatpush.bf16.msra.mxu0 %v2456
        %2506 = vmatmul.bf16.gmra.mxu0 %v1129
        %v2507 = vpop.f32.mrf.mxu0
        %v2508 = vadd.f32 %v2428, %v2507
        %v2509 = vpop.f32.mrf.mxu0
        %v2510 = vadd.f32 %v2428, %v2509
        %2511 = vdwg.mxu0
        %2512 = vmatpush.bf16.msra.mxu0 0
        %2513 = vmatpush.bf16.msra.mxu0 0
        %2514 = vmatpush.bf16.msra.mxu0 0
        %2515 = vmatpush.bf16.msra.mxu0 0
        %2516 = vmatpush.bf16.msra.mxu0 0
        %2517 = vmatpush.bf16.msra.mxu0 0
        %2518 = vmatpush.bf16.msra.mxu0 %v2461
        %2519 = vmatpush.bf16.msra.mxu0 %v2457
        %2520 = vmatmul.bf16.gmra.mxu0 %v1129
        %v2521 = vpop.f32.mrf.mxu0
        %v2522 = vadd.f32 %v2429, %v2521
        %v2523 = vpop.f32.mrf.mxu0
        %v2524 = vadd.f32 %v2429, %v2523
        %2525 = vdwg.mxu0
        %v2526 = vmax.f32 %v2480, 0.0
        %v2527 = vmax.f32 %v2494, 0.0
        %v2528 = vmax.f32 %v2508, 0.0
        %v2529 = vmax.f32 %v2522, 0.0
        %v2530 = vmax.f32 %v2482, 0.0
        %v2531 = vmax.f32 %v2496, 0.0
        %v2532 = vmax.f32 %v2510, 0.0
        %v2533 = vmax.f32 %v2524, 0.0
        %v2534 = vpack.c.bf16 %v2530, %v2526
        %v2535 = vpack.c.bf16 %v2531, %v2527
        %v2536 = vpack.c.bf16 %v2532, %v2528
        %v2537 = vpack.c.bf16 %v2533, %v2529
        %s2538 = scalar_lea.vmem %s392, 768
        %v2539 = vld [vmem:[%s2538] sm:$0xf]
        %v2540 = vld [vmem:[%s2538 + $0x4] sm:$0xf]
        %v2541 = vld [vmem:[%s2538 + $0x8] sm:$0xf]
        %v2542 = vld [vmem:[%s2538 + $0xc] sm:$0xf]
        %v2543 = vld [vmem:[%s2538 + $0x10] sm:$0xf]
        %v2544 = vld [vmem:[%s2538 + $0x14] sm:$0xf]
        %v2545 = vld [vmem:[%s2538 + $0x18] sm:$0xf]
        %v2546 = vld [vmem:[%s2538 + $0x1c] sm:$0xf]
        %v2547 = vld [vmem:[%s2538 + $0x20] sm:$0xf]
        %v2548 = vld [vmem:[%s2538 + $0x24] sm:$0xf]
        %v2549 = vld [vmem:[%s2538 + $0x28] sm:$0xf]
        %v2550 = vld [vmem:[%s2538 + $0x2c] sm:$0xf]
        %v2551 = vld [vmem:[%s2538 + $0x30] sm:$0xf]
        %v2552 = vld [vmem:[%s2538 + $0x34] sm:$0xf]
        %v2553 = vld [vmem:[%s2538 + $0x38] sm:$0xf]
        %v2554 = vld [vmem:[%s2538 + $0x3c] sm:$0xf]
        %v2555 = vld [vmem:[%s2538 + $0x40] sm:$0xf]
        %v2556 = vld [vmem:[%s2538 + $0x44] sm:$0xf]
        %v2557 = vld [vmem:[%s2538 + $0x48] sm:$0xf]
        %v2558 = vld [vmem:[%s2538 + $0x4c] sm:$0xf]
        %v2559 = vld [vmem:[%s2538 + $0x50] sm:$0xf]
        %v2560 = vld [vmem:[%s2538 + $0x54] sm:$0xf]
        %v2561 = vld [vmem:[%s2538 + $0x58] sm:$0xf]
        %v2562 = vld [vmem:[%s2538 + $0x5c] sm:$0xf]
        %v2563 = vld [vmem:[%s2538 + $0x60] sm:$0xf]
        %v2564 = vld [vmem:[%s2538 + $0x64] sm:$0xf]
        %v2565 = vld [vmem:[%s2538 + $0x68] sm:$0xf]
        %v2566 = vld [vmem:[%s2538 + $0x6c] sm:$0xf]
        %v2567 = vld [vmem:[%s2538 + $0x70] sm:$0xf]
        %v2568 = vld [vmem:[%s2538 + $0x74] sm:$0xf]
        %v2569 = vld [vmem:[%s2538 + $0x78] sm:$0xf]
        %v2570 = vld [vmem:[%s2538 + $0x7c] sm:$0xf]
        %v2571 = vld [vmem:[%s2538 + $0x80] sm:$0xf]
        %v2572 = vld [vmem:[%s2538 + $0x84] sm:$0xf]
        %v2573 = vld [vmem:[%s2538 + $0x88] sm:$0xf]
        %v2574 = vld [vmem:[%s2538 + $0x8c] sm:$0xf]
        %v2575 = vld [vmem:[%s2538 + $0x90] sm:$0xf]
        %v2576 = vld [vmem:[%s2538 + $0x94] sm:$0xf]
        %v2577 = vld [vmem:[%s2538 + $0x98] sm:$0xf]
        %v2578 = vld [vmem:[%s2538 + $0x9c] sm:$0xf]
        %v2579 = vld [vmem:[%s2538 + $0xa0] sm:$0xf]
        %v2580 = vld [vmem:[%s2538 + $0xa4] sm:$0xf]
        %v2581 = vld [vmem:[%s2538 + $0xa8] sm:$0xf]
        %v2582 = vld [vmem:[%s2538 + $0xac] sm:$0xf]
        %v2583 = vld [vmem:[%s2538 + $0xb0] sm:$0xf]
        %v2584 = vld [vmem:[%s2538 + $0xb4] sm:$0xf]
        %v2585 = vld [vmem:[%s2538 + $0xb8] sm:$0xf]
        %v2586 = vld [vmem:[%s2538 + $0xbc] sm:$0xf]
        %v2587 = vld [vmem:[%s2538 + $0xc0] sm:$0xf]
        %v2588 = vld [vmem:[%s2538 + $0xc4] sm:$0xf]
        %v2589 = vld [vmem:[%s2538 + $0xc8] sm:$0xf]
        %v2590 = vld [vmem:[%s2538 + $0xcc] sm:$0xf]
        %v2591 = vld [vmem:[%s2538 + $0xd0] sm:$0xf]
        %v2592 = vld [vmem:[%s2538 + $0xd4] sm:$0xf]
        %v2593 = vld [vmem:[%s2538 + $0xd8] sm:$0xf]
        %v2594 = vld [vmem:[%s2538 + $0xdc] sm:$0xf]
        %v2595 = vld [vmem:[%s2538 + $0xe0] sm:$0xf]
        %v2596 = vld [vmem:[%s2538 + $0xe4] sm:$0xf]
        %v2597 = vld [vmem:[%s2538 + $0xe8] sm:$0xf]
        %v2598 = vld [vmem:[%s2538 + $0xec] sm:$0xf]
        %v2599 = vld [vmem:[%s2538 + $0xf0] sm:$0xf]
        %v2600 = vld [vmem:[%s2538 + $0xf4] sm:$0xf]
        %v2601 = vld [vmem:[%s2538 + $0xf8] sm:$0xf]
        %v2602 = vld [vmem:[%s2538 + $0xfc] sm:$0xf]
        %v2667 = vunpack.c.l.b16 %v2539
        %v2668 = vunpack.c.l.b16 %v2540
        %v2669 = vunpack.c.l.b16 %v2541
        %v2670 = vunpack.c.l.b16 %v2542
        %v2671 = vunpack.c.l.b16 %v2543
        %v2672 = vunpack.c.l.b16 %v2544
        %v2673 = vunpack.c.l.b16 %v2545
        %v2674 = vunpack.c.l.b16 %v2546
        %v2675 = vunpack.c.l.b16 %v2547
        %v2676 = vunpack.c.l.b16 %v2548
        %v2677 = vunpack.c.l.b16 %v2549
        %v2678 = vunpack.c.l.b16 %v2550
        %v2679 = vunpack.c.l.b16 %v2551
        %v2680 = vunpack.c.l.b16 %v2552
        %v2681 = vunpack.c.l.b16 %v2553
        %v2682 = vunpack.c.l.b16 %v2554
        %v2683 = vunpack.c.l.b16 %v2555
        %v2684 = vunpack.c.l.b16 %v2556
        %v2685 = vunpack.c.l.b16 %v2557
        %v2686 = vunpack.c.l.b16 %v2558
        %v2687 = vunpack.c.l.b16 %v2559
        %v2688 = vunpack.c.l.b16 %v2560
        %v2689 = vunpack.c.l.b16 %v2561
        %v2690 = vunpack.c.l.b16 %v2562
        %v2691 = vunpack.c.l.b16 %v2563
        %v2692 = vunpack.c.l.b16 %v2564
        %v2693 = vunpack.c.l.b16 %v2565
        %v2694 = vunpack.c.l.b16 %v2566
        %v2695 = vunpack.c.l.b16 %v2567
        %v2696 = vunpack.c.l.b16 %v2568
        %v2697 = vunpack.c.l.b16 %v2569
        %v2698 = vunpack.c.l.b16 %v2570
        %v2699 = vunpack.c.l.b16 %v2571
        %v2700 = vunpack.c.l.b16 %v2572
        %v2701 = vunpack.c.l.b16 %v2573
        %v2702 = vunpack.c.l.b16 %v2574
        %v2703 = vunpack.c.l.b16 %v2575
        %v2704 = vunpack.c.l.b16 %v2576
        %v2705 = vunpack.c.l.b16 %v2577
        %v2706 = vunpack.c.l.b16 %v2578
        %v2707 = vunpack.c.l.b16 %v2579
        %v2708 = vunpack.c.l.b16 %v2580
        %v2709 = vunpack.c.l.b16 %v2581
        %v2710 = vunpack.c.l.b16 %v2582
        %v2711 = vunpack.c.l.b16 %v2583
        %v2712 = vunpack.c.l.b16 %v2584
        %v2713 = vunpack.c.l.b16 %v2585
        %v2714 = vunpack.c.l.b16 %v2586
        %v2715 = vunpack.c.l.b16 %v2587
        %v2716 = vunpack.c.l.b16 %v2588
        %v2717 = vunpack.c.l.b16 %v2589
        %v2718 = vunpack.c.l.b16 %v2590
        %v2719 = vunpack.c.l.b16 %v2591
        %v2720 = vunpack.c.l.b16 %v2592
        %v2721 = vunpack.c.l.b16 %v2593
        %v2722 = vunpack.c.l.b16 %v2594
        %v2723 = vunpack.c.l.b16 %v2595
        %v2724 = vunpack.c.l.b16 %v2596
        %v2725 = vunpack.c.l.b16 %v2597
        %v2726 = vunpack.c.l.b16 %v2598
        %v2727 = vunpack.c.l.b16 %v2599
        %v2728 = vunpack.c.l.b16 %v2600
        %v2729 = vunpack.c.l.b16 %v2601
        %v2730 = vunpack.c.l.b16 %v2602
        %v2731 = vpack.c.b16 %v2668, %v2667
        %v2732 = vpack.c.b16 %v2670, %v2669
        %v2733 = vpack.c.b16 %v2672, %v2671
        %v2734 = vpack.c.b16 %v2674, %v2673
        %v2735 = vpack.c.b16 %v2676, %v2675
        %v2736 = vpack.c.b16 %v2678, %v2677
        %v2737 = vpack.c.b16 %v2680, %v2679
        %v2738 = vpack.c.b16 %v2682, %v2681
        %v2739 = vpack.c.b16 %v2684, %v2683
        %v2740 = vpack.c.b16 %v2686, %v2685
        %v2741 = vpack.c.b16 %v2688, %v2687
        %v2742 = vpack.c.b16 %v2690, %v2689
        %v2743 = vpack.c.b16 %v2692, %v2691
        %v2744 = vpack.c.b16 %v2694, %v2693
        %v2745 = vpack.c.b16 %v2696, %v2695
        %v2746 = vpack.c.b16 %v2698, %v2697
        %v2747 = vpack.c.b16 %v2700, %v2699
        %v2748 = vpack.c.b16 %v2702, %v2701
        %v2749 = vpack.c.b16 %v2704, %v2703
        %v2750 = vpack.c.b16 %v2706, %v2705
        %v2751 = vpack.c.b16 %v2708, %v2707
        %v2752 = vpack.c.b16 %v2710, %v2709
        %v2753 = vpack.c.b16 %v2712, %v2711
        %v2754 = vpack.c.b16 %v2714, %v2713
        %v2755 = vpack.c.b16 %v2716, %v2715
        %v2756 = vpack.c.b16 %v2718, %v2717
        %v2757 = vpack.c.b16 %v2720, %v2719
        %v2758 = vpack.c.b16 %v2722, %v2721
        %v2759 = vpack.c.b16 %v2724, %v2723
        %v2760 = vpack.c.b16 %v2726, %v2725
        %v2761 = vpack.c.b16 %v2728, %v2727
        %v2762 = vpack.c.b16 %v2730, %v2729
        %2795 = vmatpush.bf16.msra.mxu0 %v2738
        %2796 = vmatpush.bf16.msra.mxu0 %v2737
        %2797 = vmatpush.bf16.msra.mxu0 %v2736
        %2798 = vmatpush.bf16.msra.mxu0 %v2735
        %2799 = vmatpush.bf16.msra.mxu0 %v2734
        %2800 = vmatpush.bf16.msra.mxu0 %v2733
        %2801 = vmatpush.bf16.msra.mxu0 %v2732
        %2802 = vmatpush.bf16.msra.mxu0 %v2731
        %2803 = vmatmul.bf16.gmra.mxu0 %v2534
        %v2804 = vpop.f32.mrf.mxu0
        %v2805 = vadd.f32 0.0, %v2804
        %v2806 = vpop.f32.mrf.mxu0
        %v2807 = vadd.f32 0.0, %v2806
        %2808 = vdwg.mxu0
        %2809 = vmatpush.bf16.msra.mxu0 %v2746
        %2810 = vmatpush.bf16.msra.mxu0 %v2745
        %2811 = vmatpush.bf16.msra.mxu0 %v2744
        %2812 = vmatpush.bf16.msra.mxu0 %v2743
        %2813 = vmatpush.bf16.msra.mxu0 %v2742
        %2814 = vmatpush.bf16.msra.mxu0 %v2741
        %2815 = vmatpush.bf16.msra.mxu0 %v2740
        %2816 = vmatpush.bf16.msra.mxu0 %v2739
        %2817 = vmatmul.bf16.gmra.mxu0 %v2535
        %v2818 = vpop.f32.mrf.mxu0
        %v2819 = vadd.f32 %v2805, %v2818
        %v2820 = vpop.f32.mrf.mxu0
        %v2821 = vadd.f32 %v2807, %v2820
        %2822 = vdwg.mxu0
        %2823 = vmatpush.bf16.msra.mxu0 %v2754
        %2824 = vmatpush.bf16.msra.mxu0 %v2753
        %2825 = vmatpush.bf16.msra.mxu0 %v2752
        %2826 = vmatpush.bf16.msra.mxu0 %v2751
        %2827 = vmatpush.bf16.msra.mxu0 %v2750
        %2828 = vmatpush.bf16.msra.mxu0 %v2749
        %2829 = vmatpush.bf16.msra.mxu0 %v2748
        %2830 = vmatpush.bf16.msra.mxu0 %v2747
        %2831 = vmatmul.bf16.gmra.mxu0 %v2536
        %v2832 = vpop.f32.mrf.mxu0
        %v2833 = vadd.f32 %v2819, %v2832
        %v2834 = vpop.f32.mrf.mxu0
        %v2835 = vadd.f32 %v2821, %v2834
        %2836 = vdwg.mxu0
        %2837 = vmatpush.bf16.msra.mxu0 %v2762
        %2838 = vmatpush.bf16.msra.mxu0 %v2761
        %2839 = vmatpush.bf16.msra.mxu0 %v2760
        %2840 = vmatpush.bf16.msra.mxu0 %v2759
        %2841 = vmatpush.bf16.msra.mxu0 %v2758
        %2842 = vmatpush.bf16.msra.mxu0 %v2757
        %2843 = vmatpush.bf16.msra.mxu0 %v2756
        %2844 = vmatpush.bf16.msra.mxu0 %v2755
        %2845 = vmatmul.bf16.gmra.mxu0 %v2537
        %v2846 = vpop.f32.mrf.mxu0
        %v2847 = vadd.f32 %v2833, %v2846
        %v2848 = vpop.f32.mrf.mxu0
        %v2849 = vadd.f32 %v2835, %v2848
        %2850 = vdwg.mxu0
        %v2851 = vadd.f32 %v2403, %v2847
        %v2852 = vadd.f32 %v2404, %v2849
        %v2853 = vperm.slane %v412, 3
        %v2854 = vadd.f32 %v2851, %v2853
        %v2855 = vadd.f32 %v2852, %v2853
        %v2856 = vadd.f32 %v1062, %v2854
        %v2857 = vadd.f32 %v1063, %v2855
        %v2858 = vsel %vm434, %v2856, 0.0
        %2859 = vadd.xlane.f32.xlu0 %v2858
        %v2860 = vpop.xlane.xlu0 %2859
        %v2861 = vsel %vm434, %v2857, 0.0
        %2862 = vadd.xlane.f32.xlu0 %v2861
        %v2863 = vpop.xlane.xlu0 %2862
        %v2864 = vmul.f32 %v2860, %v1019
        %v2865 = vmul.f32 %v2863, %v1019
        %v2866 = vsub.f32 %v2856, %v2864
        %v2867 = vsub.f32 %v2857, %v2865
        %v2868 = vmul.f32 %v2866, %v2866
        %v2869 = vmul.f32 %v2867, %v2867
        %v2870 = vsel %vm434, %v2868, 0.0
        %2871 = vadd.xlane.f32.xlu0 %v2870
        %v2872 = vpop.xlane.xlu0 %2871
        %v2873 = vsel %vm434, %v2869, 0.0
        %2874 = vadd.xlane.f32.xlu0 %v2873
        %v2875 = vpop.xlane.xlu0 %2874
        %v2876 = vmul.f32 %v2872, %v1019
        %v2877 = vmul.f32 %v2875, %v1019
        %v2878 = vadd.f32 %v2876, 1e-05
        %v2879 = vadd.f32 %v2877, 1e-05
        %v2880 = vrsqrt.pop %v2878
        %v2881 = vmul.f32 %v2880, %v2878
        %v2882 = vmul.f32 %v2881, %v2880
        %v2883 = vmul.f32 0.5, %v2882
        %v2884 = vsub.f32 1.5, %v2883
        %v2885 = vmul.f32 %v2880, %v2884
        %vm2886 = vweird.f32 %v2878
        %vm2887 = vweird.f32 %v2880
        %vm2888 = vmor %vm2886, %vm2887
        %v2889 = vsel %vm2888, %v2880, %v2885
        %v2890 = vrsqrt.pop %v2879
        %v2891 = vmul.f32 %v2890, %v2879
        %v2892 = vmul.f32 %v2891, %v2890
        %v2893 = vmul.f32 0.5, %v2892
        %v2894 = vsub.f32 1.5, %v2893
        %v2895 = vmul.f32 %v2890, %v2894
        %vm2896 = vweird.f32 %v2879
        %vm2897 = vweird.f32 %v2890
        %vm2898 = vmor %vm2896, %vm2897
        %v2899 = vsel %vm2898, %v2890, %v2895
        %v2900 = vmul.f32 %v2866, %v2889
        %v2901 = vmul.f32 %v2867, %v2899
        %v2902 = vperm.slane %v412, 4
        %v2903 = vmul.f32 %v2900, %v2902
        %v2904 = vmul.f32 %v2901, %v2902
        %v2905 = vperm.slane %v412, 5
        %v2906 = vadd.f32 %v2903, %v2905
        %v2907 = vadd.f32 %v2904, %v2905
        %2908 = vst.msk [vmem:[#allocation2] sm:$0xff] %vm434, %v2906
        %2909 = vst.msk [vmem:[#allocation2 + $0x8] sm:$0xff] %vm434, %v2907
        %p2910 = scmp.eq.s32.totalorder %s20, 1
        // Predicated region
        $region57: #{tpu_custom_call.1} parent=51 // pred_check
          %p2911 = pneg %p2910
        $region58: #{tpu_custom_call.1} parent=51 // pred_check_branch
          %2913 = sbr.rel (%p2911) target = $region60
        $region59: #{tpu_custom_call.1} parent=51 // pred_region
          %2914 = vst.msk [vmem:[#allocation3] sm:$0xff] %vm434, %v2906
          %2915 = vst.msk [vmem:[#allocation3 + $0x8] sm:$0xff] %vm434, %v2907
        $region60: #{tpu_custom_call.1} parent=51 // pred_fallthru
          _
        // Predicated region
        $region61: #{tpu_custom_call.1} parent=51 // pred_check
          %p2916 = pneg %p236
        $region62: #{tpu_custom_call.1} parent=51 // pred_check_branch
          %2918 = sbr.rel (%p2916) target = $region64
        $region63: #{tpu_custom_call.1} parent=51 // pred_region
          %2920 = vsyncadd [#allocation4], 0
          %s2921 = sshll.u32 [#allocation3], 4
          %s2922 = int_to_ptr.vmem [resolvable:$true] %s2921
          %s2923 = sshll.u32 %s8, 4
          %s2924 = int_to_ptr.hbm [resolvable:$true] %s2923
          %2929 = dma.vmem_to_hbm [thread:$0]  %s2922, 256, %s2924, [#allocation4], 128, 128, 8
        $region64: #{tpu_custom_call.1} parent=51 // pred_fallthru
          _
        // Predicated region
        $region65: #{tpu_custom_call.1} parent=51 // pred_check
          %p2930 = pneg %p236
        $region66: #{tpu_custom_call.1} parent=51 // pred_check_branch
          %2932 = sbr.rel (%p2930) target = $region68
        $region67: #{tpu_custom_call.1} parent=51 // pred_region
          %2934 = dma.done [#allocation4], 256
        $region68: #{tpu_custom_call.1} parent=51 // pred_fallthru
          _
      $region52: #{tpu_custom_call.1} parent=5 // pred_fallthru
        _
      %p2935 = scmp.le.s32.totalorder 2, %s15
      // Predicated region
      $region69: #{tpu_custom_call.1} parent=5 // pred_check
        %p2936 = pneg %p2935
      $region70: #{tpu_custom_call.1} parent=5 // pred_check_branch
        %2938 = sbr.rel (%p2936) target = $region72
      $region71: #{tpu_custom_call.1} parent=5 // pred_region
        %s2939 = ssub.s32 %s15, 2
      $region72: #{tpu_custom_call.1} parent=5 // pred_fallthru
        _
    $region6: #{tpu_custom_call.1} parent=1 // loop_footer
      %s19 = sadd.s32 1, %s15
    $region7: #{tpu_custom_call.1} parent=1 // loop_footer_branch
      %14 = sbr.rel target = $region3
    $region8: #{tpu_custom_call.1} parent=1 // loop_exit
      _
    %2940 = vsyncpa [#allocation4], 1
    %s2941 = scalar_lea.sflag [#allocation4], 1
    %2942 = vsyncpa %s2941, 1

</llo_original>
